<compile_context>
chip_gen: v6e
topology: v6e:2x2x1
jax: 0.10.0
libtpu: 0.0.40
codegen_flags: <defaults>
</compile_context>

<pallas_src>
import math
from functools import partial

import numpy as np
import jax
import jax.numpy as jnp
from jax import lax
from jax.experimental import pallas as pl
from jax.experimental.pallas import tpu as pltpu


# --------------------------- fused CDC-conv kernel ---------------------------
def _cdc_conv_kernel(x_ref, w_ref, b_ref, o_ref):
    """One (batch, row-tile) step of the folded 3x3 central-difference conv.

    x_ref : (1, H+2, W+2, C_in)  host-padded NHWC image (whole image; constant
                                 block index across the row-tile axis, so it is
                                 DMA'd once per image)
    w_ref : (9, C_out, C_in)     folded weight, tap-major (k = kh*3 + kw)
    b_ref : (C_out, 1)           effective bias (zeros if the module has none)
    o_ref : (1, C_out, TH*W)     channels-first, lane-dense output row-tile
    """
    _, _, Wp2, C_in = x_ref.shape
    W_img = Wp2 - 2
    _, C_out, THW = o_ref.shape
    TH = THW // W_img

    # First padded row of this output row-tile.
    row0 = pl.multiple_of(pl.program_id(1) * TH, TH)

    # 9 accumulating K=C_in matmuls straight off shifted windows of the padded
    # input -- no im2col buffer, no zero-fill, f32 accumulation throughout.
    acc = jnp.zeros((C_out, THW), jnp.float32)
    for k in range(9):
        kh, kw = divmod(k, 3)
        win = x_ref[:, pl.ds(row0 + kh, TH), kw:kw + W_img, :]   # (1,TH,W,Cin)
        x_col = win.reshape(THW, C_in)                           # (TH*W, Cin)
        acc = acc + lax.dot_general(
            w_ref[k], x_col,
            dimension_numbers=(((1,), (1,)), ((), ())),          # contract Cin
            preferred_element_type=jnp.float32)                  # (C_out,TH*W)

    o_ref[0] = (acc + b_ref[...]).astype(o_ref.dtype)


# --------------------------------- wrapper -----------------------------------
def _pick_tile_h(H, W, target_n=2048):
    """Largest row-tile TH (divisor of H) with TH*W <= target_n and TH*W a
    multiple of 128 (lane-dense output block).  Falls back to the whole image."""
    if H * W <= target_n:
        return H
    best = H
    for th in range(1, H):
        if H % th == 0 and th * W <= target_n and (th * W) % 128 == 0:
            best = th
    return best


@partial(jax.jit, static_argnames=("theta", "tile_h", "compute_dtype"))
def conv2d_cd_forward(x, weight, bias=None, *, theta=0.7, tile_h=None,
                      compute_dtype=jnp.bfloat16):
    """Forward of Conv2d_cd for the module's default config (3x3, s=1, p=1).

    x: (B, C_in, H, W) NCHW (PyTorch layout); weight: (C_out, C_in, 3, 3);
    bias: (C_out,) or None.  Returns (B, C_out, H, W) in x.dtype.
    """
    B, C_in, H, W = x.shape
    C_out, C_in_w, KH, KW = weight.shape
    assert (C_in_w, KH, KW) == (C_in, 3, 3), "only the default 3x3 config"
    # TODO(synk): stride / dilation / groups other than the nn.Conv2d defaults
    # (1, 1, 1) and kernel_size != 3 are not implemented.

    # Fold the central-difference term into the centre tap (traced once, jit).
    if math.fabs(theta - 0.0) >= 1e-8:
        kdiff = weight.sum(axis=(2, 3))                        # (C_out, C_in)
        w_fold = weight.at[:, :, 1, 1].add(-theta * kdiff)
        b_eff = None if bias is None else (1.0 - theta) * bias
    else:
        w_fold, b_eff = weight, bias

    # (C_out, C_in, 3, 3) -> (9, C_out, C_in), tap-major (k = kh*3 + kw).
    w_taps = jnp.transpose(w_fold, (2, 3, 0, 1)).reshape(9, C_out, C_in)
    w_taps = w_taps.astype(compute_dtype)
    b_vec = (jnp.zeros((C_out,), jnp.float32) if b_eff is None
             else b_eff.astype(jnp.float32)).reshape(C_out, 1)

    # Halo padding (and MXU-operand cast) on the host: one fused XLA op under
    # jit; the kernel never zero-fills or rebuilds a padded scratch.
    x_pad = jnp.pad(jnp.transpose(x, (0, 2, 3, 1)).astype(compute_dtype),
                    ((0, 0), (1, 1), (1, 1), (0, 0)))          # (B,H+2,W+2,Ci)

    if tile_h is None:
        tile_h = _pick_tile_h(H, W)
    assert H % tile_h == 0, "tile_h must divide H"
    num_tiles = H // tile_h

    # Explicit VMEM budget from the actual (double-buffered) block footprint,
    # clamped to limits that are safe on v5e/v6e/v7x.
    cdt = np.dtype(compute_dtype).itemsize

    def _ru(v, m):
        return (v + m - 1) // m * m

    vmem_est = (2 * (H + 2) * _ru(W + 2, 8) * _ru(C_in, 128) * cdt          # x
                + 2 * _ru(C_out, 8) * _ru(tile_h * W, 128) * x.dtype.itemsize
                + 2 * 9 * _ru(C_out, 8) * _ru(C_in, 128) * cdt              # w
                + 4 * _ru(C_out, 8) * _ru(tile_h * W, 128) * 4)             # acc
    vmem_limit = int(min(max(2 * vmem_est, 16 * 1024 * 1024), 64 * 1024 * 1024))

    out_flat = pl.pallas_call(
        _cdc_conv_kernel,
        out_shape=jax.ShapeDtypeStruct((B, C_out, H * W), x.dtype),
        grid_spec=pltpu.PrefetchScalarGridSpec(
            num_scalar_prefetch=0,
            grid=(B, num_tiles),
            in_specs=[
                # Whole padded image; block index constant across the row-tile
                # axis -> fetched once per image, revisited across tiles.
                pl.BlockSpec((1, H + 2, W + 2, C_in),
                             lambda b, t: (b, 0, 0, 0)),
                # Grid-invariant weight / bias (tiny blocks).
                pl.BlockSpec((9, C_out, C_in), lambda b, t: (0, 0, 0)),
                pl.BlockSpec((C_out, 1), lambda b, t: (0, 0)),
            ],
            out_specs=pl.BlockSpec((1, C_out, tile_h * W),
                                   lambda b, t: (b, 0, t)),
        ),
        compiler_params=pltpu.CompilerParams(
            dimension_semantics=("parallel", "arbitrary"),
            vmem_limit_bytes=vmem_limit),
    )(x_pad, w_taps, b_vec)

    return out_flat.reshape(B, C_out, H, W)


# --------------------------- pure-JAX reference -------------------------------
def conv2d_cd_reference(x, weight, bias=None, theta=0.7):
    dn = ("NCHW", "OIHW", "NCHW")
    out_normal = lax.conv_general_dilated(
        x, weight, window_strides=(1, 1), padding=((1, 1), (1, 1)),
        dimension_numbers=dn, precision=lax.Precision.HIGHEST)
    if bias is not None:
        out_normal = out_normal + bias.reshape(1, -1, 1, 1)
    if math.fabs(theta - 0.0) < 1e-8:
        return out_normal
    kdiff = weight.sum(axis=(2, 3))[:, :, None, None]          # (C_out,C_in,1,1)
    out_diff = lax.conv_general_dilated(
        x, kdiff, window_strides=(1, 1), padding=((0, 0), (0, 0)),
        dimension_numbers=dn, precision=lax.Precision.HIGHEST)
    if bias is not None:
        out_diff = out_diff + bias.reshape(1, -1, 1, 1)
    return out_normal - theta * out_diff


if __name__ == "__main__":
    key = jax.random.PRNGKey(0)
    k1, k2, k3 = jax.random.split(key, 3)
    B, C_IN, C_OUT, H, W = 2, 8, 8, 16, 16

    x = jax.random.normal(k1, (B, C_IN, H, W), jnp.float32)
    weight = jax.random.normal(k2, (C_OUT, C_IN, 3, 3), jnp.float32) / math.sqrt(9 * C_IN)
    bias = jax.random.normal(k3, (C_OUT,), jnp.float32) * 0.1

    # Case 1: module defaults (bias=False, theta=0.7), f32 MXU operands.
    out = jax.block_until_ready(
        conv2d_cd_forward(x, weight, None, theta=0.7, compute_dtype=jnp.float32))
    ref = conv2d_cd_reference(x, weight, None, 0.7)
    assert out.shape == (B, C_OUT, H, W)
    assert bool(jnp.isfinite(out).all())
    err = float(jnp.max(jnp.abs(out - ref)))
    assert err < 1e-4, f"f32 theta=0.7 max abs diff {err}"

    # Case 2: bf16 MXU operands (default), f32 accumulation.
    out_bf = jax.block_until_ready(conv2d_cd_forward(x, weight, None, theta=0.7))
    abs_err = float(jnp.max(jnp.abs(out_bf - ref)))
    rel_err = float(jnp.linalg.norm(out_bf - ref) / jnp.linalg.norm(ref))
    assert abs_err < 1e-1 and rel_err < 2e-2, f"bf16 errs abs={abs_err} rel={rel_err}"

    # Case 3: theta == 0 branch (plain 3x3 conv), f32.
    out0 = jax.block_until_ready(
        conv2d_cd_forward(x, weight, None, theta=0.0, compute_dtype=jnp.float32))
    err0 = float(jnp.max(jnp.abs(out0 - conv2d_cd_reference(x, weight, None, 0.0))))
    assert err0 < 1e-4, f"theta=0.0 max abs diff {err0}"

    # Case 4: bias=True variant of the module, f32.
    outb = jax.block_until_ready(
        conv2d_cd_forward(x, weight, bias, theta=0.7, compute_dtype=jnp.float32))
    errb = float(jnp.max(jnp.abs(outb - conv2d_cd_reference(x, weight, bias, 0.7))))
    assert errb < 1e-4, f"bias max abs diff {errb}"

    # Case 5: multi-row-tile grid path (tile_h=8 -> 2 tiles, lane-dense 128).
    outt = jax.block_until_ready(
        conv2d_cd_forward(x, weight, bias, theta=0.7, tile_h=8,
                          compute_dtype=jnp.float32))
    errt = float(jnp.max(jnp.abs(outt - conv2d_cd_reference(x, weight, bias, 0.7))))
    assert errt < 1e-4, f"tiled max abs diff {errt}"

    print("KERNEL_OK")
</pallas_src>

<mosaic_0001>
module attributes {stable_mosaic.version = 11 : i64} {
  func.func @_cdc_conv_kernel(%arg0: i32, %arg1: i32, %arg2: memref<1x18x18x8xf32, #tpu.memory_space<vmem>>, %arg3: memref<9x8x8xf32, #tpu.memory_space<vmem>>, %arg4: memref<8x1xf32, #tpu.memory_space<vmem>>, %arg5: memref<1x8x256xf32, #tpu.memory_space<vmem>>) attributes {dimension_semantics = [#tpu.dimension_semantics<parallel>, #tpu.dimension_semantics<arbitrary>], iteration_bounds = array<i64: 2, 1>, scalar_prefetch = 0 : i64, scratch_operands = 0 : i64, tpu.core_type = #tpu.core_type<tc>, window_params = [{transform_indices = @transform_0, window_bounds = array<i64: 1, 18, 18, 8>}, {pipeline_mode = #tpu.pipeline_mode<synchronous>, transform_indices = @transform_1, window_bounds = array<i64: 9, 8, 8>}, {pipeline_mode = #tpu.pipeline_mode<synchronous>, transform_indices = @transform_2, window_bounds = array<i64: 8, 1>}, {transform_indices = @transform_3, window_bounds = array<i64: 1, 8, 256>}]} {
    %c16_i32 = arith.constant 16 : i32
    %0 = arith.muli %arg1, %c16_i32 : i32
    %1 = tpu.assume_multiple %0, 16 : i32
    %cst = arith.constant 0.000000e+00 : f32
    %2 = vector.broadcast %cst : f32 to vector<8x256xf32>
    %c0_i32 = arith.constant 0 : i32
    %3 = arith.addi %1, %c0_i32 : i32
    %c0 = arith.constant 0 : index
    %4 = arith.index_cast %3 : i32 to index
    %c0_0 = arith.constant 0 : index
    %c0_1 = arith.constant 0 : index
    %5 = vector.load %arg2[%c0, %4, %c0_0, %c0_1] : memref<1x18x18x8xf32, #tpu.memory_space<vmem>>, vector<1x16x16x8xf32>
    %6 = vector.shape_cast %5 : vector<1x16x16x8xf32> to vector<256x8xf32>
    %c0_2 = arith.constant 0 : index
    %c0_3 = arith.constant 0 : index
    %c0_4 = arith.constant 0 : index
    %7 = vector.load %arg3[%c0_2, %c0_3, %c0_4] : memref<9x8x8xf32, #tpu.memory_space<vmem>>, vector<1x8x8xf32>
    %8 = vector.shape_cast %7 : vector<1x8x8xf32> to vector<8x8xf32>
    %cst_5 = arith.constant dense<0.000000e+00> : vector<8x256xf32>
    %9 = tpu.matmul %8, %6, %cst_5 {dimension_numbers = #tpu.dot_dimension_numbers<[1], [1], [0], [0], [0, 0, 1, 0], [], []>} : vector<8x8xf32>, vector<256x8xf32>, vector<8x256xf32> -> vector<8x256xf32>
    %10 = arith.addf %2, %9 : vector<8x256xf32>
    %c0_i32_6 = arith.constant 0 : i32
    %11 = arith.addi %1, %c0_i32_6 : i32
    %c0_7 = arith.constant 0 : index
    %12 = arith.index_cast %11 : i32 to index
    %c1 = arith.constant 1 : index
    %c0_8 = arith.constant 0 : index
    %13 = vector.load %arg2[%c0_7, %12, %c1, %c0_8] : memref<1x18x18x8xf32, #tpu.memory_space<vmem>>, vector<1x16x16x8xf32>
    %14 = vector.shape_cast %13 : vector<1x16x16x8xf32> to vector<256x8xf32>
    %c1_9 = arith.constant 1 : index
    %c0_10 = arith.constant 0 : index
    %c0_11 = arith.constant 0 : index
    %15 = vector.load %arg3[%c1_9, %c0_10, %c0_11] : memref<9x8x8xf32, #tpu.memory_space<vmem>>, vector<1x8x8xf32>
    %16 = vector.shape_cast %15 : vector<1x8x8xf32> to vector<8x8xf32>
    %cst_12 = arith.constant dense<0.000000e+00> : vector<8x256xf32>
    %17 = tpu.matmul %16, %14, %cst_12 {dimension_numbers = #tpu.dot_dimension_numbers<[1], [1], [0], [0], [0, 0, 1, 0], [], []>} : vector<8x8xf32>, vector<256x8xf32>, vector<8x256xf32> -> vector<8x256xf32>
    %18 = arith.addf %10, %17 : vector<8x256xf32>
    %c0_i32_13 = arith.constant 0 : i32
    %19 = arith.addi %1, %c0_i32_13 : i32
    %c0_14 = arith.constant 0 : index
    %20 = arith.index_cast %19 : i32 to index
    %c2 = arith.constant 2 : index
    %c0_15 = arith.constant 0 : index
    %21 = vector.load %arg2[%c0_14, %20, %c2, %c0_15] : memref<1x18x18x8xf32, #tpu.memory_space<vmem>>, vector<1x16x16x8xf32>
    %22 = vector.shape_cast %21 : vector<1x16x16x8xf32> to vector<256x8xf32>
    %c2_16 = arith.constant 2 : index
    %c0_17 = arith.constant 0 : index
    %c0_18 = arith.constant 0 : index
    %23 = vector.load %arg3[%c2_16, %c0_17, %c0_18] : memref<9x8x8xf32, #tpu.memory_space<vmem>>, vector<1x8x8xf32>
    %24 = vector.shape_cast %23 : vector<1x8x8xf32> to vector<8x8xf32>
    %cst_19 = arith.constant dense<0.000000e+00> : vector<8x256xf32>
    %25 = tpu.matmul %24, %22, %cst_19 {dimension_numbers = #tpu.dot_dimension_numbers<[1], [1], [0], [0], [0, 0, 1, 0], [], []>} : vector<8x8xf32>, vector<256x8xf32>, vector<8x256xf32> -> vector<8x256xf32>
    %26 = arith.addf %18, %25 : vector<8x256xf32>
    %c1_i32 = arith.constant 1 : i32
    %27 = arith.addi %1, %c1_i32 : i32
    %c0_20 = arith.constant 0 : index
    %28 = arith.index_cast %27 : i32 to index
    %c0_21 = arith.constant 0 : index
    %c0_22 = arith.constant 0 : index
    %29 = vector.load %arg2[%c0_20, %28, %c0_21, %c0_22] : memref<1x18x18x8xf32, #tpu.memory_space<vmem>>, vector<1x16x16x8xf32>
    %30 = vector.shape_cast %29 : vector<1x16x16x8xf32> to vector<256x8xf32>
    %c3 = arith.constant 3 : index
    %c0_23 = arith.constant 0 : index
    %c0_24 = arith.constant 0 : index
    %31 = vector.load %arg3[%c3, %c0_23, %c0_24] : memref<9x8x8xf32, #tpu.memory_space<vmem>>, vector<1x8x8xf32>
    %32 = vector.shape_cast %31 : vector<1x8x8xf32> to vector<8x8xf32>
    %cst_25 = arith.constant dense<0.000000e+00> : vector<8x256xf32>
    %33 = tpu.matmul %32, %30, %cst_25 {dimension_numbers = #tpu.dot_dimension_numbers<[1], [1], [0], [0], [0, 0, 1, 0], [], []>} : vector<8x8xf32>, vector<256x8xf32>, vector<8x256xf32> -> vector<8x256xf32>
    %34 = arith.addf %26, %33 : vector<8x256xf32>
    %c1_i32_26 = arith.constant 1 : i32
    %35 = arith.addi %1, %c1_i32_26 : i32
    %c0_27 = arith.constant 0 : index
    %36 = arith.index_cast %35 : i32 to index
    %c1_28 = arith.constant 1 : index
    %c0_29 = arith.constant 0 : index
    %37 = vector.load %arg2[%c0_27, %36, %c1_28, %c0_29] : memref<1x18x18x8xf32, #tpu.memory_space<vmem>>, vector<1x16x16x8xf32>
    %38 = vector.shape_cast %37 : vector<1x16x16x8xf32> to vector<256x8xf32>
    %c4 = arith.constant 4 : index
    %c0_30 = arith.constant 0 : index
    %c0_31 = arith.constant 0 : index
    %39 = vector.load %arg3[%c4, %c0_30, %c0_31] : memref<9x8x8xf32, #tpu.memory_space<vmem>>, vector<1x8x8xf32>
    %40 = vector.shape_cast %39 : vector<1x8x8xf32> to vector<8x8xf32>
    %cst_32 = arith.constant dense<0.000000e+00> : vector<8x256xf32>
    %41 = tpu.matmul %40, %38, %cst_32 {dimension_numbers = #tpu.dot_dimension_numbers<[1], [1], [0], [0], [0, 0, 1, 0], [], []>} : vector<8x8xf32>, vector<256x8xf32>, vector<8x256xf32> -> vector<8x256xf32>
    %42 = arith.addf %34, %41 : vector<8x256xf32>
    %c1_i32_33 = arith.constant 1 : i32
    %43 = arith.addi %1, %c1_i32_33 : i32
    %c0_34 = arith.constant 0 : index
    %44 = arith.index_cast %43 : i32 to index
    %c2_35 = arith.constant 2 : index
    %c0_36 = arith.constant 0 : index
    %45 = vector.load %arg2[%c0_34, %44, %c2_35, %c0_36] : memref<1x18x18x8xf32, #tpu.memory_space<vmem>>, vector<1x16x16x8xf32>
    %46 = vector.shape_cast %45 : vector<1x16x16x8xf32> to vector<256x8xf32>
    %c5 = arith.constant 5 : index
    %c0_37 = arith.constant 0 : index
    %c0_38 = arith.constant 0 : index
    %47 = vector.load %arg3[%c5, %c0_37, %c0_38] : memref<9x8x8xf32, #tpu.memory_space<vmem>>, vector<1x8x8xf32>
    %48 = vector.shape_cast %47 : vector<1x8x8xf32> to vector<8x8xf32>
    %cst_39 = arith.constant dense<0.000000e+00> : vector<8x256xf32>
    %49 = tpu.matmul %48, %46, %cst_39 {dimension_numbers = #tpu.dot_dimension_numbers<[1], [1], [0], [0], [0, 0, 1, 0], [], []>} : vector<8x8xf32>, vector<256x8xf32>, vector<8x256xf32> -> vector<8x256xf32>
    %50 = arith.addf %42, %49 : vector<8x256xf32>
    %c2_i32 = arith.constant 2 : i32
    %51 = arith.addi %1, %c2_i32 : i32
    %c0_40 = arith.constant 0 : index
    %52 = arith.index_cast %51 : i32 to index
    %c0_41 = arith.constant 0 : index
    %c0_42 = arith.constant 0 : index
    %53 = vector.load %arg2[%c0_40, %52, %c0_41, %c0_42] : memref<1x18x18x8xf32, #tpu.memory_space<vmem>>, vector<1x16x16x8xf32>
    %54 = vector.shape_cast %53 : vector<1x16x16x8xf32> to vector<256x8xf32>
    %c6 = arith.constant 6 : index
    %c0_43 = arith.constant 0 : index
    %c0_44 = arith.constant 0 : index
    %55 = vector.load %arg3[%c6, %c0_43, %c0_44] : memref<9x8x8xf32, #tpu.memory_space<vmem>>, vector<1x8x8xf32>
    %56 = vector.shape_cast %55 : vector<1x8x8xf32> to vector<8x8xf32>
    %cst_45 = arith.constant dense<0.000000e+00> : vector<8x256xf32>
    %57 = tpu.matmul %56, %54, %cst_45 {dimension_numbers = #tpu.dot_dimension_numbers<[1], [1], [0], [0], [0, 0, 1, 0], [], []>} : vector<8x8xf32>, vector<256x8xf32>, vector<8x256xf32> -> vector<8x256xf32>
    %58 = arith.addf %50, %57 : vector<8x256xf32>
    %c2_i32_46 = arith.constant 2 : i32
    %59 = arith.addi %1, %c2_i32_46 : i32
    %c0_47 = arith.constant 0 : index
    %60 = arith.index_cast %59 : i32 to index
    %c1_48 = arith.constant 1 : index
    %c0_49 = arith.constant 0 : index
    %61 = vector.load %arg2[%c0_47, %60, %c1_48, %c0_49] : memref<1x18x18x8xf32, #tpu.memory_space<vmem>>, vector<1x16x16x8xf32>
    %62 = vector.shape_cast %61 : vector<1x16x16x8xf32> to vector<256x8xf32>
    %c7 = arith.constant 7 : index
    %c0_50 = arith.constant 0 : index
    %c0_51 = arith.constant 0 : index
    %63 = vector.load %arg3[%c7, %c0_50, %c0_51] : memref<9x8x8xf32, #tpu.memory_space<vmem>>, vector<1x8x8xf32>
    %64 = vector.shape_cast %63 : vector<1x8x8xf32> to vector<8x8xf32>
    %cst_52 = arith.constant dense<0.000000e+00> : vector<8x256xf32>
    %65 = tpu.matmul %64, %62, %cst_52 {dimension_numbers = #tpu.dot_dimension_numbers<[1], [1], [0], [0], [0, 0, 1, 0], [], []>} : vector<8x8xf32>, vector<256x8xf32>, vector<8x256xf32> -> vector<8x256xf32>
    %66 = arith.addf %58, %65 : vector<8x256xf32>
    %c2_i32_53 = arith.constant 2 : i32
    %67 = arith.addi %1, %c2_i32_53 : i32
    %c0_54 = arith.constant 0 : index
    %68 = arith.index_cast %67 : i32 to index
    %c2_55 = arith.constant 2 : index
    %c0_56 = arith.constant 0 : index
    %69 = vector.load %arg2[%c0_54, %68, %c2_55, %c0_56] : memref<1x18x18x8xf32, #tpu.memory_space<vmem>>, vector<1x16x16x8xf32>
    %70 = vector.shape_cast %69 : vector<1x16x16x8xf32> to vector<256x8xf32>
    %c8 = arith.constant 8 : index
    %c0_57 = arith.constant 0 : index
    %c0_58 = arith.constant 0 : index
    %71 = vector.load %arg3[%c8, %c0_57, %c0_58] : memref<9x8x8xf32, #tpu.memory_space<vmem>>, vector<1x8x8xf32>
    %72 = vector.shape_cast %71 : vector<1x8x8xf32> to vector<8x8xf32>
    %cst_59 = arith.constant dense<0.000000e+00> : vector<8x256xf32>
    %73 = tpu.matmul %72, %70, %cst_59 {dimension_numbers = #tpu.dot_dimension_numbers<[1], [1], [0], [0], [0, 0, 1, 0], [], []>} : vector<8x8xf32>, vector<256x8xf32>, vector<8x256xf32> -> vector<8x256xf32>
    %74 = arith.addf %66, %73 : vector<8x256xf32>
    %c0_60 = arith.constant 0 : index
    %c0_61 = arith.constant 0 : index
    %75 = vector.load %arg4[%c0_60, %c0_61] : memref<8x1xf32, #tpu.memory_space<vmem>>, vector<8x1xf32>
    %76 = vector.broadcast %75 : vector<8x1xf32> to vector<8x256xf32>
    %77 = arith.addf %74, %76 : vector<8x256xf32>
    %c0_62 = arith.constant 0 : index
    %c0_63 = arith.constant 0 : index
    %c0_64 = arith.constant 0 : index
    %78 = vector.load %arg5[%c0_62, %c0_63, %c0_64] : memref<1x8x256xf32, #tpu.memory_space<vmem>>, vector<1x8x256xf32>
    %79 = vector.shape_cast %78 : vector<1x8x256xf32> to vector<8x256xf32>
    %80 = vector.shape_cast %77 : vector<8x256xf32> to vector<1x8x256xf32>
    tpu.vector_store %arg5[%c0_62, %c0_63, %c0_64], %80 {strides = array<i32>} : memref<1x8x256xf32, #tpu.memory_space<vmem>>, vector<1x8x256xf32>,
    return
  }
  func.func @transform_0(%arg0: i32, %arg1: i32) -> (i32, i32, i32, i32) {
    %c0_i32 = arith.constant 0 : i32
    %c0_i32_0 = arith.constant 0 : i32
    %c0_i32_1 = arith.constant 0 : i32
    %c0_i32_2 = arith.constant 0 : i32
    return %arg0, %c0_i32, %c0_i32_0, %c0_i32_1 : i32, i32, i32, i32
  }
  func.func @transform_1(%arg0: i32, %arg1: i32) -> (i32, i32, i32) {
    %c0_i32 = arith.constant 0 : i32
    %c0_i32_0 = arith.constant 0 : i32
    %c0_i32_1 = arith.constant 0 : i32
    %c0_i32_2 = arith.constant 0 : i32
    return %c0_i32, %c0_i32_0, %c0_i32_1 : i32, i32, i32
  }
  func.func @transform_2(%arg0: i32, %arg1: i32) -> (i32, i32) {
    %c0_i32 = arith.constant 0 : i32
    %c0_i32_0 = arith.constant 0 : i32
    %c0_i32_1 = arith.constant 0 : i32
    return %c0_i32, %c0_i32_0 : i32, i32
  }
  func.func @transform_3(%arg0: i32, %arg1: i32) -> (i32, i32, i32) {
    %c0_i32 = arith.constant 0 : i32
    %c0_i32_0 = arith.constant 0 : i32
    return %arg0, %c0_i32, %arg1 : i32, i32, i32
  }
}

</mosaic_0001>

<llo_original>
// kernel: conv2d_cd_forward.1
$region0: #{conv2d_cd_forward.1}
  #allocation0 [shape = 'u32[]', space=smem, size = 0x4, offset = 0x4, fixed_abs, tag = 'smem constant byte address 0x4 - core index']
  #allocation1 [shape = 'u32[144,128]{1,0:T(1,128)}', space=vmem, size = 0x12000, scoped, tag = 'internal scratch']
  %s0 = inlined_call_operand.vmem [shape: f32[2,18,18,8], index: 0, kind: input, shape index: {}]
  %s1 = inlined_call_operand.vmem [shape: f32[9,8,8], index: 1, kind: input, shape index: {}]
  %s2 = inlined_call_operand.vmem [shape: f32[8,1], index: 2, kind: input, shape index: {}]
  %s3 = inlined_call_operand.vmem [shape: f32[2,8,256], index: 3, kind: output, shape index: {}]
  %s4 = sld [smem:[#allocation0]]
  $region45: #{conv2d_cd_forward.1} parent=0
    _
  %s6 = ssub.s32 1, %s4
  %s7 = scalar_select 0, %s6, %s4
  loop: start=0, step=1, limit=4
  $region2: #{conv2d_cd_forward.1} parent=0 // loop_pre_header
    _
  $region3: #{conv2d_cd_forward.1} parent=0 // loop_header
    %s9 = sphi 0, %s13
    %p10 = scmp.ge.s32.totalorder %s9, 4
    %s16 = sphi 0, %s28
    %s17 = sphi 0, %s24
    %s18 = sphi 0, %s16
    %s19 = sphi 0, %s17
    %s20 = sphi 0, %s18
    %s21 = sphi 0, %s19
    %s31 = sphi 0, %s33
    %s34 = sphi 0, %s31
    %s35 = sphi 0, %s34
    %s51 = sphi 0, %s35
    %s55 = sphi 0, %s55
    %s57 = sphi 0, %s55
    %s58 = sphi 0, %s57
    %s72 = sphi 0, %s58
    %s76 = sphi 0, %s76
    %s78 = sphi 0, %s76
    %s79 = sphi 0, %s78
    %s93 = sphi 0, %s79
    %s101 = sphi 0, %s103
    %s104 = sphi 0, %s101
    %s105 = sphi 0, %s104
    %s121 = sphi 0, %s105
  $region4: #{conv2d_cd_forward.1} parent=0 // loop_header_branch
    %12 = sbr.rel (%p10) target = $region8
  $region5: #{conv2d_cd_forward.1} parent=0 // loop_body
    %s14 = ssub.s32 %s9, 1
    %s15 = ssub.s32 %s9, 2
    %s22 = sadd.s32 1, %s17
    %p23 = scmp.ge.s32.totalorder %s22, 1
    %s24 = scalar_select %p23, 0, %s22
    %s25 = sadd.s32 1, %s16
    %s26 = scalar_select %p23, %s25, %s16
    %p27 = scmp.ge.s32.totalorder %s26, 2
    %s28 = scalar_select %p27, 0, %s26
    %s29 = ssub.s32 %s16, %s28
    %p30 = scmp.eq.s32.totalorder %s29, 0
    %s32 = sadd.s32 %s31, 1
    %s33 = scalar_select %p30, %s31, %s32
    %p36 = pneg %p30
    %p37 = scmp.eq.s32.totalorder %s9, 1
    %p38 = por %p36, %p37
    %p39 = scmp.ne.s32.totalorder %s31, %s34
    %p40 = scmp.eq.s32.totalorder %s9, 0
    %p41 = por %p39, %p40
    %p42 = scmp.ne.s32.totalorder %s31, %s34
    %p43 = scmp.eq.s32.totalorder %s14, 1
    %p44 = por %p42, %p43
    %p45 = scmp.ne.s32.totalorder %s34, %s35
    %p46 = scmp.eq.s32.totalorder %s14, 0
    %p47 = por %p45, %p46
    %p48 = scmp.ne.s32.totalorder %s34, %s35
    %p49 = scmp.eq.s32.totalorder %s15, 1
    %p50 = por %p48, %p49
    %p52 = scmp.ne.s32.totalorder %s35, %s51
    %p53 = scmp.eq.s32.totalorder %s15, 0
    %p54 = por %p52, %p53
    %s56 = sadd.s32 %s55, 1
    %p59 = scmp.eq.s32.totalorder %s9, 1
    %p60 = scmp.ne.s32.totalorder %s55, %s57
    %p61 = scmp.eq.s32.totalorder %s9, 0
    %p62 = por %p60, %p61
    %p63 = scmp.ne.s32.totalorder %s55, %s57
    %p64 = scmp.eq.s32.totalorder %s14, 1
    %p65 = por %p63, %p64
    %p66 = scmp.ne.s32.totalorder %s57, %s58
    %p67 = scmp.eq.s32.totalorder %s14, 0
    %p68 = por %p66, %p67
    %p69 = scmp.ne.s32.totalorder %s57, %s58
    %p70 = scmp.eq.s32.totalorder %s15, 1
    %p71 = por %p69, %p70
    %p73 = scmp.ne.s32.totalorder %s58, %s72
    %p74 = scmp.eq.s32.totalorder %s15, 0
    %p75 = por %p73, %p74
    %s77 = sadd.s32 %s76, 1
    %p80 = scmp.eq.s32.totalorder %s9, 1
    %p81 = scmp.ne.s32.totalorder %s76, %s78
    %p82 = scmp.eq.s32.totalorder %s9, 0
    %p83 = por %p81, %p82
    %p84 = scmp.ne.s32.totalorder %s76, %s78
    %p85 = scmp.eq.s32.totalorder %s14, 1
    %p86 = por %p84, %p85
    %p87 = scmp.ne.s32.totalorder %s78, %s79
    %p88 = scmp.eq.s32.totalorder %s14, 0
    %p89 = por %p87, %p88
    %p90 = scmp.ne.s32.totalorder %s78, %s79
    %p91 = scmp.eq.s32.totalorder %s15, 1
    %p92 = por %p90, %p91
    %p94 = scmp.ne.s32.totalorder %s79, %s93
    %p95 = scmp.eq.s32.totalorder %s15, 0
    %p96 = por %p94, %p95
    %s97 = ssub.s32 %s16, %s28
    %s98 = ssub.s32 %s17, %s24
    %s99 = sor.u32 %s97, %s98
    %p100 = scmp.eq.s32.totalorder %s99, 0
    %s102 = sadd.s32 %s101, 1
    %s103 = scalar_select %p100, %s101, %s102
    %p106 = pneg %p100
    %p107 = scmp.eq.s32.totalorder %s9, 1
    %p108 = por %p106, %p107
    %p109 = scmp.ne.s32.totalorder %s101, %s104
    %p110 = scmp.eq.s32.totalorder %s9, 0
    %p111 = por %p109, %p110
    %p112 = scmp.ne.s32.totalorder %s101, %s104
    %p113 = scmp.eq.s32.totalorder %s14, 1
    %p114 = por %p112, %p113
    %p115 = scmp.ne.s32.totalorder %s104, %s105
    %p116 = scmp.eq.s32.totalorder %s14, 0
    %p117 = por %p115, %p116
    %p118 = scmp.ne.s32.totalorder %s104, %s105
    %p119 = scmp.eq.s32.totalorder %s15, 1
    %p120 = por %p118, %p119
    %p122 = scmp.ne.s32.totalorder %s105, %s121
    %p123 = scmp.eq.s32.totalorder %s15, 0
    %p124 = por %p122, %p123
    %p125 = scmp.le.s32.totalorder 1, %s9
    %p126 = scmp.lt.s32.totalorder %s9, 3
    %p127 = pnand %p125, %p126
    %p128 = pneg %p127
    // Predicated region
    $region9: #{conv2d_cd_forward.1} parent=5 // pred_check
      _
    $region10: #{conv2d_cd_forward.1} parent=5 // pred_check_branch
      %130 = sbr.rel (%p127) target = $region12
    $region11: #{conv2d_cd_forward.1} parent=5 // pred_region
      %s131 = ssub.s32 %s9, 1
      // Predicated region
      $region13: #{conv2d_cd_forward.1} parent=11 // pred_check
        %p132 = pneg %p68
      $region14: #{conv2d_cd_forward.1} parent=11 // pred_check_branch
        %134 = sbr.rel (%p132) target = $region16
      $region15: #{conv2d_cd_forward.1} parent=11 // pred_region
        _
      $region16: #{conv2d_cd_forward.1} parent=11 // pred_fallthru
        _
      // Predicated region
      $region17: #{conv2d_cd_forward.1} parent=11 // pred_check
        %p135 = pneg %p89
      $region18: #{conv2d_cd_forward.1} parent=11 // pred_check_branch
        %137 = sbr.rel (%p135) target = $region20
      $region19: #{conv2d_cd_forward.1} parent=11 // pred_region
        _
      $region20: #{conv2d_cd_forward.1} parent=11 // pred_fallthru
        _
    $region12: #{conv2d_cd_forward.1} parent=5 // pred_fallthru
      _
    %p138 = scmp.lt.s32.totalorder %s9, 2
    // Predicated region
    $region21: #{conv2d_cd_forward.1} parent=5 // pred_check
      %p139 = pneg %p138
    $region22: #{conv2d_cd_forward.1} parent=5 // pred_check_branch
      %141 = sbr.rel (%p139) target = $region24
    $region23: #{conv2d_cd_forward.1} parent=5 // pred_region
      // Predicated region
      $region25: #{conv2d_cd_forward.1} parent=23 // pred_check
        %p142 = pneg %p41
      $region26: #{conv2d_cd_forward.1} parent=23 // pred_check_branch
        %144 = sbr.rel (%p142) target = $region28
      $region27: #{conv2d_cd_forward.1} parent=23 // pred_region
        %p145 = scmp.lt.s32.totalorder %s16, 1
        %s146 = scalar_select %p145, %s16, 1
        %s147 = smul.addr %s146, 54
        %s148 = smul.addr %s147, 8
        %s149 = scalar_lea.vmem %s0, %s148
      $region28: #{conv2d_cd_forward.1} parent=23 // pred_fallthru
        _
    $region24: #{conv2d_cd_forward.1} parent=5 // pred_fallthru
      _
    %p150 = scmp.le.s32.totalorder 1, %s9
    %p151 = scmp.lt.s32.totalorder %s9, 3
    %p152 = pnand %p150, %p151
    %p153 = pneg %p152
    // Predicated region
    $region29: #{conv2d_cd_forward.1} parent=5 // pred_check
      _
    $region30: #{conv2d_cd_forward.1} parent=5 // pred_check_branch
      %155 = sbr.rel (%p152) target = $region32
    $region31: #{conv2d_cd_forward.1} parent=5 // pred_region
      %s156 = ssub.s32 %s9, 1
      %p157 = scmp.lt.s32.totalorder %s18, 1
      %s158 = scalar_select %p157, %s18, 1
      %s159 = smul.addr %s158, 54
      %s160 = smul.addr %s159, 8
      %s161 = scalar_lea.vmem %s0, %s160
      %p162 = pneg %p47
      %p163 = pneg %p44
      %p164 = pneg %p68
      %p165 = pneg %p65
      %p166 = pneg %p89
      %p167 = pneg %p86
      %p168 = pneg %p117
      %p169 = pneg %p114
      %s170 = smul.u32 2, %s19
      %p171 = scmp.lt.s32.totalorder %s18, 1
      %s172 = scalar_select %p171, %s18, 1
      %p173 = scmp.lt.s32.totalorder %s170, 1
      %s174 = scalar_select %p173, %s170, 1
      %s175 = smul.addr %s172, 2
      %s176 = sadd.s32 %s174, %s175
      %s177 = smul.addr %s176, 8
      %s178 = scalar_lea.vmem %s3, %s177
      %p179 = scmp.lt.s32.totalorder %s18, 1
      %s180 = scalar_select %p179, %s18, 1
      %s181 = smul.addr %s180, 54
      %s182 = smul.addr %s181, 8
      %s183 = scalar_lea.vmem %s0, %s182
      %s184 = smul.u32 2, %s19
      %p185 = scmp.lt.s32.totalorder %s18, 1
      %s186 = scalar_select %p185, %s18, 1
      %p187 = scmp.lt.s32.totalorder %s184, 1
      %s188 = scalar_select %p187, %s184, 1
      %s189 = smul.addr %s186, 2
      %s190 = sadd.s32 %s188, %s189
      %s191 = smul.addr %s190, 8
      %s192 = scalar_lea.vmem %s3, %s191
      %s193 = smul.u32 2, %s19
      %s194 = smul.u32 %s19, 16
      %s195 = smul.u32 %s194, 24
      %s196 = scalar_lea.vmem %s183, %s195
      %v197 = vld [vmem:[%s196] sm:$0xff]
      %v198 = vld [vmem:[%s196 + $0x8] sm:$0xff]
      %v199 = vld [vmem:[%s196 + $0x18] sm:$0xff]
      %v200 = vld [vmem:[%s196 + $0x20] sm:$0xff]
      %v201 = vld [vmem:[%s196 + $0x30] sm:$0xff]
      %v202 = vld [vmem:[%s196 + $0x38] sm:$0xff]
      %v203 = vld [vmem:[%s196 + $0x48] sm:$0xff]
      %v204 = vld [vmem:[%s196 + $0x50] sm:$0xff]
      %v205 = vld [vmem:[%s196 + $0x60] sm:$0xff]
      %v206 = vld [vmem:[%s196 + $0x68] sm:$0xff]
      %v207 = vld [vmem:[%s196 + $0x78] sm:$0xff]
      %v208 = vld [vmem:[%s196 + $0x80] sm:$0xff]
      %v209 = vld [vmem:[%s196 + $0x90] sm:$0xff]
      %v210 = vld [vmem:[%s196 + $0x98] sm:$0xff]
      %v211 = vld [vmem:[%s196 + $0xa8] sm:$0xff]
      %v212 = vld [vmem:[%s196 + $0xb0] sm:$0xff]
      %v213 = vld [vmem:[%s196 + $0xc0] sm:$0xff]
      %v214 = vld [vmem:[%s196 + $0xc8] sm:$0xff]
      %v215 = vld [vmem:[%s196 + $0xd8] sm:$0xff]
      %v216 = vld [vmem:[%s196 + $0xe0] sm:$0xff]
      %v217 = vld [vmem:[%s196 + $0xf0] sm:$0xff]
      %v218 = vld [vmem:[%s196 + $0xf8] sm:$0xff]
      %v219 = vld [vmem:[%s196 + $0x108] sm:$0xff]
      %v220 = vld [vmem:[%s196 + $0x110] sm:$0xff]
      %v221 = vld [vmem:[%s196 + $0x120] sm:$0xff]
      %v222 = vld [vmem:[%s196 + $0x128] sm:$0xff]
      %v223 = vld [vmem:[%s196 + $0x138] sm:$0xff]
      %v224 = vld [vmem:[%s196 + $0x140] sm:$0xff]
      %v225 = vld [vmem:[%s196 + $0x150] sm:$0xff]
      %v226 = vld [vmem:[%s196 + $0x158] sm:$0xff]
      %v227 = vld [vmem:[%s196 + $0x168] sm:$0xff]
      %v228 = vld [vmem:[%s196 + $0x170] sm:$0xff]
      %v229 = vld [vmem:[%s1] sm:$0xff]
      %v230 = vld [vmem:[%s196 + $0x1] sm:$0xff]
      %v231 = vld [vmem:[%s196 + $0x9] sm:$0xff]
      %v232 = vld [vmem:[%s196 + $0x19] sm:$0xff]
      %v233 = vld [vmem:[%s196 + $0x21] sm:$0xff]
      %v234 = vld [vmem:[%s196 + $0x31] sm:$0xff]
      %v235 = vld [vmem:[%s196 + $0x39] sm:$0xff]
      %v236 = vld [vmem:[%s196 + $0x49] sm:$0xff]
      %v237 = vld [vmem:[%s196 + $0x51] sm:$0xff]
      %v238 = vld [vmem:[%s196 + $0x61] sm:$0xff]
      %v239 = vld [vmem:[%s196 + $0x69] sm:$0xff]
      %v240 = vld [vmem:[%s196 + $0x79] sm:$0xff]
      %v241 = vld [vmem:[%s196 + $0x81] sm:$0xff]
      %v242 = vld [vmem:[%s196 + $0x91] sm:$0xff]
      %v243 = vld [vmem:[%s196 + $0x99] sm:$0xff]
      %v244 = vld [vmem:[%s196 + $0xa9] sm:$0xff]
      %v245 = vld [vmem:[%s196 + $0xb1] sm:$0xff]
      %v246 = vld [vmem:[%s196 + $0xc1] sm:$0xff]
      %v247 = vld [vmem:[%s196 + $0xc9] sm:$0xff]
      %v248 = vld [vmem:[%s196 + $0xd9] sm:$0xff]
      %v249 = vld [vmem:[%s196 + $0xe1] sm:$0xff]
      %v250 = vld [vmem:[%s196 + $0xf1] sm:$0xff]
      %v251 = vld [vmem:[%s196 + $0xf9] sm:$0xff]
      %v252 = vld [vmem:[%s196 + $0x109] sm:$0xff]
      %v253 = vld [vmem:[%s196 + $0x111] sm:$0xff]
      %v254 = vld [vmem:[%s196 + $0x121] sm:$0xff]
      %v255 = vld [vmem:[%s196 + $0x129] sm:$0xff]
      %v256 = vld [vmem:[%s196 + $0x139] sm:$0xff]
      %v257 = vld [vmem:[%s196 + $0x141] sm:$0xff]
      %v258 = vld [vmem:[%s196 + $0x151] sm:$0xff]
      %v259 = vld [vmem:[%s196 + $0x159] sm:$0xff]
      %v260 = vld [vmem:[%s196 + $0x169] sm:$0xff]
      %v261 = vld [vmem:[%s196 + $0x171] sm:$0xff]
      %s262 = scalar_lea.vmem %s1, 8
      %v263 = vld [vmem:[%s262] sm:$0xff]
      %vm264 = vcmask 64512
      %v266 = vsel %vm264, %v263, 0
      %v269 = vsel %vm264, %v230, 0
      %v272 = vsel %vm264, %v231, 0
      %v275 = vsel %vm264, %v232, 0
      %v278 = vsel %vm264, %v233, 0
      %v281 = vsel %vm264, %v234, 0
      %v284 = vsel %vm264, %v235, 0
      %v287 = vsel %vm264, %v236, 0
      %v290 = vsel %vm264, %v237, 0
      %v293 = vsel %vm264, %v238, 0
      %v296 = vsel %vm264, %v239, 0
      %v299 = vsel %vm264, %v240, 0
      %v302 = vsel %vm264, %v241, 0
      %v305 = vsel %vm264, %v242, 0
      %v308 = vsel %vm264, %v243, 0
      %v311 = vsel %vm264, %v244, 0
      %v314 = vsel %vm264, %v245, 0
      %v317 = vsel %vm264, %v246, 0
      %v320 = vsel %vm264, %v247, 0
      %v323 = vsel %vm264, %v248, 0
      %v326 = vsel %vm264, %v249, 0
      %v329 = vsel %vm264, %v250, 0
      %v332 = vsel %vm264, %v251, 0
      %v335 = vsel %vm264, %v252, 0
      %v338 = vsel %vm264, %v253, 0
      %v341 = vsel %vm264, %v254, 0
      %v344 = vsel %vm264, %v255, 0
      %v347 = vsel %vm264, %v256, 0
      %v350 = vsel %vm264, %v257, 0
      %v353 = vsel %vm264, %v258, 0
      %v356 = vsel %vm264, %v259, 0
      %v359 = vsel %vm264, %v260, 0
      %v362 = vsel %vm264, %v261, 0
      %364 = vmatprep.subr.mxu0 0.0
      %365 = vmatpush1.xpose.msra.mxu0 %v314
      %366 = vmatprep.subr.mxu0 0.0
      %367 = vmatpush1.xpose.msra.mxu0 %v311
      %368 = vmatprep.subr.mxu0 0.0
      %369 = vmatpush1.xpose.msra.mxu0 %v308
      %370 = vmatprep.subr.mxu0 0.0
      %371 = vmatpush1.xpose.msra.mxu0 %v305
      %372 = vmatprep.subr.mxu0 0.0
      %373 = vmatpush1.xpose.msra.mxu0 %v302
      %374 = vmatprep.subr.mxu0 0.0
      %375 = vmatpush1.xpose.msra.mxu0 %v299
      %376 = vmatprep.subr.mxu0 0.0
      %377 = vmatpush1.xpose.msra.mxu0 %v296
      %378 = vmatprep.subr.mxu0 0.0
      %379 = vmatpush1.xpose.msra.mxu0 %v293
      %380 = vmatprep.subr.mxu0 0.0
      %381 = vmatpush1.xpose.msra.mxu0 %v290
      %382 = vmatprep.subr.mxu0 0.0
      %383 = vmatpush1.xpose.msra.mxu0 %v287
      %384 = vmatprep.subr.mxu0 0.0
      %385 = vmatpush1.xpose.msra.mxu0 %v284
      %386 = vmatprep.subr.mxu0 0.0
      %387 = vmatpush1.xpose.msra.mxu0 %v281
      %388 = vmatprep.subr.mxu0 0.0
      %389 = vmatpush1.xpose.msra.mxu0 %v278
      %390 = vmatprep.subr.mxu0 0.0
      %391 = vmatpush1.xpose.msra.mxu0 %v275
      %392 = vmatprep.subr.mxu0 0.0
      %393 = vmatpush1.xpose.msra.mxu0 %v272
      %394 = vmatprep.subr.mxu0 0.0
      %395 = vmatpush1.xpose.msra.mxu0 %v269
      %396 = vmatprep.subr.mxu0 0.0
      %397 = vmatpush2.xpose.msra.mxu0 %v362
      %398 = vmatprep.subr.mxu0 0.0
      %399 = vmatpush2.xpose.msra.mxu0 %v359
      %400 = vmatprep.subr.mxu0 0.0
      %401 = vmatpush2.xpose.msra.mxu0 %v356
      %402 = vmatprep.subr.mxu0 0.0
      %403 = vmatpush2.xpose.msra.mxu0 %v353
      %404 = vmatprep.subr.mxu0 0.0
      %405 = vmatpush2.xpose.msra.mxu0 %v350
      %406 = vmatprep.subr.mxu0 0.0
      %407 = vmatpush2.xpose.msra.mxu0 %v347
      %408 = vmatprep.subr.mxu0 0.0
      %409 = vmatpush2.xpose.msra.mxu0 %v344
      %410 = vmatprep.subr.mxu0 0.0
      %411 = vmatpush2.xpose.msra.mxu0 %v341
      %412 = vmatprep.subr.mxu0 0.0
      %413 = vmatpush2.xpose.msra.mxu0 %v338
      %414 = vmatprep.subr.mxu0 0.0
      %415 = vmatpush2.xpose.msra.mxu0 %v335
      %416 = vmatprep.subr.mxu0 0.0
      %417 = vmatpush2.xpose.msra.mxu0 %v332
      %418 = vmatprep.subr.mxu0 0.0
      %419 = vmatpush2.xpose.msra.mxu0 %v329
      %420 = vmatprep.subr.mxu0 0.0
      %421 = vmatpush2.xpose.msra.mxu0 %v326
      %422 = vmatprep.subr.mxu0 0.0
      %423 = vmatpush2.xpose.msra.mxu0 %v323
      %424 = vmatprep.subr.mxu0 0.0
      %425 = vmatpush2.xpose.msra.mxu0 %v320
      %426 = vmatprep.subr.mxu0 0.0
      %427 = vmatpush2.xpose.msra.mxu0 %v317
      %428 = vmatprep.mubr.f32.mxu0 0.0
      %429 = vmatmul.mubr.f32.gmra.mxu0 %v266
      %v430 = vpop.f32.mrf.mxu0
      %v431 = vadd.f32 0.0, %v430
      %v432 = vpop.f32.mrf.mxu0
      %v433 = vadd.f32 0.0, %v432
      %434 = vdwg.mxu0
      %v436 = vsel %vm264, %v229, 0
      %v439 = vsel %vm264, %v197, 0
      %v442 = vsel %vm264, %v198, 0
      %v445 = vsel %vm264, %v199, 0
      %v448 = vsel %vm264, %v200, 0
      %v451 = vsel %vm264, %v201, 0
      %v454 = vsel %vm264, %v202, 0
      %v457 = vsel %vm264, %v203, 0
      %v460 = vsel %vm264, %v204, 0
      %v463 = vsel %vm264, %v205, 0
      %v466 = vsel %vm264, %v206, 0
      %v469 = vsel %vm264, %v207, 0
      %v472 = vsel %vm264, %v208, 0
      %v475 = vsel %vm264, %v209, 0
      %v478 = vsel %vm264, %v210, 0
      %v481 = vsel %vm264, %v211, 0
      %v484 = vsel %vm264, %v212, 0
      %v487 = vsel %vm264, %v213, 0
      %v490 = vsel %vm264, %v214, 0
      %v493 = vsel %vm264, %v215, 0
      %v496 = vsel %vm264, %v216, 0
      %v499 = vsel %vm264, %v217, 0
      %v502 = vsel %vm264, %v218, 0
      %v505 = vsel %vm264, %v219, 0
      %v508 = vsel %vm264, %v220, 0
      %v511 = vsel %vm264, %v221, 0
      %v514 = vsel %vm264, %v222, 0
      %v517 = vsel %vm264, %v223, 0
      %v520 = vsel %vm264, %v224, 0
      %v523 = vsel %vm264, %v225, 0
      %v526 = vsel %vm264, %v226, 0
      %v529 = vsel %vm264, %v227, 0
      %v532 = vsel %vm264, %v228, 0
      %534 = vmatprep.subr.mxu0 0.0
      %535 = vmatpush1.xpose.msra.mxu0 %v484
      %536 = vmatprep.subr.mxu0 0.0
      %537 = vmatpush1.xpose.msra.mxu0 %v481
      %538 = vmatprep.subr.mxu0 0.0
      %539 = vmatpush1.xpose.msra.mxu0 %v478
      %540 = vmatprep.subr.mxu0 0.0
      %541 = vmatpush1.xpose.msra.mxu0 %v475
      %542 = vmatprep.subr.mxu0 0.0
      %543 = vmatpush1.xpose.msra.mxu0 %v472
      %544 = vmatprep.subr.mxu0 0.0
      %545 = vmatpush1.xpose.msra.mxu0 %v469
      %546 = vmatprep.subr.mxu0 0.0
      %547 = vmatpush1.xpose.msra.mxu0 %v466
      %548 = vmatprep.subr.mxu0 0.0
      %549 = vmatpush1.xpose.msra.mxu0 %v463
      %550 = vmatprep.subr.mxu0 0.0
      %551 = vmatpush1.xpose.msra.mxu0 %v460
      %552 = vmatprep.subr.mxu0 0.0
      %553 = vmatpush1.xpose.msra.mxu0 %v457
      %554 = vmatprep.subr.mxu0 0.0
      %555 = vmatpush1.xpose.msra.mxu0 %v454
      %556 = vmatprep.subr.mxu0 0.0
      %557 = vmatpush1.xpose.msra.mxu0 %v451
      %558 = vmatprep.subr.mxu0 0.0
      %559 = vmatpush1.xpose.msra.mxu0 %v448
      %560 = vmatprep.subr.mxu0 0.0
      %561 = vmatpush1.xpose.msra.mxu0 %v445
      %562 = vmatprep.subr.mxu0 0.0
      %563 = vmatpush1.xpose.msra.mxu0 %v442
      %564 = vmatprep.subr.mxu0 0.0
      %565 = vmatpush1.xpose.msra.mxu0 %v439
      %566 = vmatprep.subr.mxu0 0.0
      %567 = vmatpush2.xpose.msra.mxu0 %v532
      %568 = vmatprep.subr.mxu0 0.0
      %569 = vmatpush2.xpose.msra.mxu0 %v529
      %570 = vmatprep.subr.mxu0 0.0
      %571 = vmatpush2.xpose.msra.mxu0 %v526
      %572 = vmatprep.subr.mxu0 0.0
      %573 = vmatpush2.xpose.msra.mxu0 %v523
      %574 = vmatprep.subr.mxu0 0.0
      %575 = vmatpush2.xpose.msra.mxu0 %v520
      %576 = vmatprep.subr.mxu0 0.0
      %577 = vmatpush2.xpose.msra.mxu0 %v517
      %578 = vmatprep.subr.mxu0 0.0
      %579 = vmatpush2.xpose.msra.mxu0 %v514
      %580 = vmatprep.subr.mxu0 0.0
      %581 = vmatpush2.xpose.msra.mxu0 %v511
      %582 = vmatprep.subr.mxu0 0.0
      %583 = vmatpush2.xpose.msra.mxu0 %v508
      %584 = vmatprep.subr.mxu0 0.0
      %585 = vmatpush2.xpose.msra.mxu0 %v505
      %586 = vmatprep.subr.mxu0 0.0
      %587 = vmatpush2.xpose.msra.mxu0 %v502
      %588 = vmatprep.subr.mxu0 0.0
      %589 = vmatpush2.xpose.msra.mxu0 %v499
      %590 = vmatprep.subr.mxu0 0.0
      %591 = vmatpush2.xpose.msra.mxu0 %v496
      %592 = vmatprep.subr.mxu0 0.0
      %593 = vmatpush2.xpose.msra.mxu0 %v493
      %594 = vmatprep.subr.mxu0 0.0
      %595 = vmatpush2.xpose.msra.mxu0 %v490
      %596 = vmatprep.subr.mxu0 0.0
      %597 = vmatpush2.xpose.msra.mxu0 %v487
      %598 = vmatprep.mubr.f32.mxu0 0.0
      %599 = vmatmul.mubr.f32.gmra.mxu0 %v436
      %v600 = vpop.f32.mrf.mxu0
      %v601 = vadd.f32 %v431, %v600
      %v602 = vpop.f32.mrf.mxu0
      %v603 = vadd.f32 %v433, %v602
      %604 = vdwg.mxu0
      %v605 = vld [vmem:[%s196 + $0x2] sm:$0xff]
      %v606 = vld [vmem:[%s196 + $0xa] sm:$0xff]
      %v607 = vld [vmem:[%s196 + $0x1a] sm:$0xff]
      %v608 = vld [vmem:[%s196 + $0x22] sm:$0xff]
      %v609 = vld [vmem:[%s196 + $0x32] sm:$0xff]
      %v610 = vld [vmem:[%s196 + $0x3a] sm:$0xff]
      %v611 = vld [vmem:[%s196 + $0x4a] sm:$0xff]
      %v612 = vld [vmem:[%s196 + $0x52] sm:$0xff]
      %v613 = vld [vmem:[%s196 + $0x62] sm:$0xff]
      %v614 = vld [vmem:[%s196 + $0x6a] sm:$0xff]
      %v615 = vld [vmem:[%s196 + $0x7a] sm:$0xff]
      %v616 = vld [vmem:[%s196 + $0x82] sm:$0xff]
      %v617 = vld [vmem:[%s196 + $0x92] sm:$0xff]
      %v618 = vld [vmem:[%s196 + $0x9a] sm:$0xff]
      %v619 = vld [vmem:[%s196 + $0xaa] sm:$0xff]
      %v620 = vld [vmem:[%s196 + $0xb2] sm:$0xff]
      %v621 = vld [vmem:[%s196 + $0xc2] sm:$0xff]
      %v622 = vld [vmem:[%s196 + $0xca] sm:$0xff]
      %v623 = vld [vmem:[%s196 + $0xda] sm:$0xff]
      %v624 = vld [vmem:[%s196 + $0xe2] sm:$0xff]
      %v625 = vld [vmem:[%s196 + $0xf2] sm:$0xff]
      %v626 = vld [vmem:[%s196 + $0xfa] sm:$0xff]
      %v627 = vld [vmem:[%s196 + $0x10a] sm:$0xff]
      %v628 = vld [vmem:[%s196 + $0x112] sm:$0xff]
      %v629 = vld [vmem:[%s196 + $0x122] sm:$0xff]
      %v630 = vld [vmem:[%s196 + $0x12a] sm:$0xff]
      %v631 = vld [vmem:[%s196 + $0x13a] sm:$0xff]
      %v632 = vld [vmem:[%s196 + $0x142] sm:$0xff]
      %v633 = vld [vmem:[%s196 + $0x152] sm:$0xff]
      %v634 = vld [vmem:[%s196 + $0x15a] sm:$0xff]
      %v635 = vld [vmem:[%s196 + $0x16a] sm:$0xff]
      %v636 = vld [vmem:[%s196 + $0x172] sm:$0xff]
      %s637 = scalar_lea.vmem %s1, 16
      %v638 = vld [vmem:[%s637] sm:$0xff]
      %v640 = vsel %vm264, %v638, 0
      %v643 = vsel %vm264, %v605, 0
      %v646 = vsel %vm264, %v606, 0
      %v649 = vsel %vm264, %v607, 0
      %v652 = vsel %vm264, %v608, 0
      %v655 = vsel %vm264, %v609, 0
      %v658 = vsel %vm264, %v610, 0
      %v661 = vsel %vm264, %v611, 0
      %v664 = vsel %vm264, %v612, 0
      %v667 = vsel %vm264, %v613, 0
      %v670 = vsel %vm264, %v614, 0
      %v673 = vsel %vm264, %v615, 0
      %v676 = vsel %vm264, %v616, 0
      %v679 = vsel %vm264, %v617, 0
      %v682 = vsel %vm264, %v618, 0
      %v685 = vsel %vm264, %v619, 0
      %v688 = vsel %vm264, %v620, 0
      %v691 = vsel %vm264, %v621, 0
      %v694 = vsel %vm264, %v622, 0
      %v697 = vsel %vm264, %v623, 0
      %v700 = vsel %vm264, %v624, 0
      %v703 = vsel %vm264, %v625, 0
      %v706 = vsel %vm264, %v626, 0
      %v709 = vsel %vm264, %v627, 0
      %v712 = vsel %vm264, %v628, 0
      %v715 = vsel %vm264, %v629, 0
      %v718 = vsel %vm264, %v630, 0
      %v721 = vsel %vm264, %v631, 0
      %v724 = vsel %vm264, %v632, 0
      %v727 = vsel %vm264, %v633, 0
      %v730 = vsel %vm264, %v634, 0
      %v733 = vsel %vm264, %v635, 0
      %v736 = vsel %vm264, %v636, 0
      %738 = vmatprep.subr.mxu0 0.0
      %739 = vmatpush1.xpose.msra.mxu0 %v688
      %740 = vmatprep.subr.mxu0 0.0
      %741 = vmatpush1.xpose.msra.mxu0 %v685
      %742 = vmatprep.subr.mxu0 0.0
      %743 = vmatpush1.xpose.msra.mxu0 %v682
      %744 = vmatprep.subr.mxu0 0.0
      %745 = vmatpush1.xpose.msra.mxu0 %v679
      %746 = vmatprep.subr.mxu0 0.0
      %747 = vmatpush1.xpose.msra.mxu0 %v676
      %748 = vmatprep.subr.mxu0 0.0
      %749 = vmatpush1.xpose.msra.mxu0 %v673
      %750 = vmatprep.subr.mxu0 0.0
      %751 = vmatpush1.xpose.msra.mxu0 %v670
      %752 = vmatprep.subr.mxu0 0.0
      %753 = vmatpush1.xpose.msra.mxu0 %v667
      %754 = vmatprep.subr.mxu0 0.0
      %755 = vmatpush1.xpose.msra.mxu0 %v664
      %756 = vmatprep.subr.mxu0 0.0
      %757 = vmatpush1.xpose.msra.mxu0 %v661
      %758 = vmatprep.subr.mxu0 0.0
      %759 = vmatpush1.xpose.msra.mxu0 %v658
      %760 = vmatprep.subr.mxu0 0.0
      %761 = vmatpush1.xpose.msra.mxu0 %v655
      %762 = vmatprep.subr.mxu0 0.0
      %763 = vmatpush1.xpose.msra.mxu0 %v652
      %764 = vmatprep.subr.mxu0 0.0
      %765 = vmatpush1.xpose.msra.mxu0 %v649
      %766 = vmatprep.subr.mxu0 0.0
      %767 = vmatpush1.xpose.msra.mxu0 %v646
      %768 = vmatprep.subr.mxu0 0.0
      %769 = vmatpush1.xpose.msra.mxu0 %v643
      %770 = vmatprep.subr.mxu0 0.0
      %771 = vmatpush2.xpose.msra.mxu0 %v736
      %772 = vmatprep.subr.mxu0 0.0
      %773 = vmatpush2.xpose.msra.mxu0 %v733
      %774 = vmatprep.subr.mxu0 0.0
      %775 = vmatpush2.xpose.msra.mxu0 %v730
      %776 = vmatprep.subr.mxu0 0.0
      %777 = vmatpush2.xpose.msra.mxu0 %v727
      %778 = vmatprep.subr.mxu0 0.0
      %779 = vmatpush2.xpose.msra.mxu0 %v724
      %780 = vmatprep.subr.mxu0 0.0
      %781 = vmatpush2.xpose.msra.mxu0 %v721
      %782 = vmatprep.subr.mxu0 0.0
      %783 = vmatpush2.xpose.msra.mxu0 %v718
      %784 = vmatprep.subr.mxu0 0.0
      %785 = vmatpush2.xpose.msra.mxu0 %v715
      %786 = vmatprep.subr.mxu0 0.0
      %787 = vmatpush2.xpose.msra.mxu0 %v712
      %788 = vmatprep.subr.mxu0 0.0
      %789 = vmatpush2.xpose.msra.mxu0 %v709
      %790 = vmatprep.subr.mxu0 0.0
      %791 = vmatpush2.xpose.msra.mxu0 %v706
      %792 = vmatprep.subr.mxu0 0.0
      %793 = vmatpush2.xpose.msra.mxu0 %v703
      %794 = vmatprep.subr.mxu0 0.0
      %795 = vmatpush2.xpose.msra.mxu0 %v700
      %796 = vmatprep.subr.mxu0 0.0
      %797 = vmatpush2.xpose.msra.mxu0 %v697
      %798 = vmatprep.subr.mxu0 0.0
      %799 = vmatpush2.xpose.msra.mxu0 %v694
      %800 = vmatprep.subr.mxu0 0.0
      %801 = vmatpush2.xpose.msra.mxu0 %v691
      %802 = vmatprep.mubr.f32.mxu0 0.0
      %803 = vmatmul.mubr.f32.gmra.mxu0 %v640
      %v804 = vpop.f32.mrf.mxu0
      %v805 = vadd.f32 0.0, %v804
      %v806 = vpop.f32.mrf.mxu0
      %v807 = vadd.f32 0.0, %v806
      %808 = vdwg.mxu0
      %v809 = vadd.f32 %v601, %v805
      %v810 = vadd.f32 %v603, %v807
      %s811 = sadd.s32 %s194, 1
      %s812 = smul.u32 %s811, 24
      %s813 = scalar_lea.vmem %s183, %s812
      %v814 = vld [vmem:[%s813] sm:$0xff]
      %v815 = vld [vmem:[%s813 + $0x8] sm:$0xff]
      %v816 = vld [vmem:[%s813 + $0x18] sm:$0xff]
      %v817 = vld [vmem:[%s813 + $0x20] sm:$0xff]
      %v818 = vld [vmem:[%s813 + $0x30] sm:$0xff]
      %v819 = vld [vmem:[%s813 + $0x38] sm:$0xff]
      %v820 = vld [vmem:[%s813 + $0x48] sm:$0xff]
      %v821 = vld [vmem:[%s813 + $0x50] sm:$0xff]
      %v822 = vld [vmem:[%s813 + $0x60] sm:$0xff]
      %v823 = vld [vmem:[%s813 + $0x68] sm:$0xff]
      %v824 = vld [vmem:[%s813 + $0x78] sm:$0xff]
      %v825 = vld [vmem:[%s813 + $0x80] sm:$0xff]
      %v826 = vld [vmem:[%s813 + $0x90] sm:$0xff]
      %v827 = vld [vmem:[%s813 + $0x98] sm:$0xff]
      %v828 = vld [vmem:[%s813 + $0xa8] sm:$0xff]
      %v829 = vld [vmem:[%s813 + $0xb0] sm:$0xff]
      %v830 = vld [vmem:[%s813 + $0xc0] sm:$0xff]
      %v831 = vld [vmem:[%s813 + $0xc8] sm:$0xff]
      %v832 = vld [vmem:[%s813 + $0xd8] sm:$0xff]
      %v833 = vld [vmem:[%s813 + $0xe0] sm:$0xff]
      %v834 = vld [vmem:[%s813 + $0xf0] sm:$0xff]
      %v835 = vld [vmem:[%s813 + $0xf8] sm:$0xff]
      %v836 = vld [vmem:[%s813 + $0x108] sm:$0xff]
      %v837 = vld [vmem:[%s813 + $0x110] sm:$0xff]
      %v838 = vld [vmem:[%s813 + $0x120] sm:$0xff]
      %v839 = vld [vmem:[%s813 + $0x128] sm:$0xff]
      %v840 = vld [vmem:[%s813 + $0x138] sm:$0xff]
      %v841 = vld [vmem:[%s813 + $0x140] sm:$0xff]
      %v842 = vld [vmem:[%s813 + $0x150] sm:$0xff]
      %v843 = vld [vmem:[%s813 + $0x158] sm:$0xff]
      %v844 = vld [vmem:[%s813 + $0x168] sm:$0xff]
      %v845 = vld [vmem:[%s813 + $0x170] sm:$0xff]
      %s846 = scalar_lea.vmem %s1, 24
      %v847 = vld [vmem:[%s846] sm:$0xff]
      %v849 = vsel %vm264, %v847, 0
      %v852 = vsel %vm264, %v814, 0
      %v855 = vsel %vm264, %v815, 0
      %v858 = vsel %vm264, %v816, 0
      %v861 = vsel %vm264, %v817, 0
      %v864 = vsel %vm264, %v818, 0
      %v867 = vsel %vm264, %v819, 0
      %v870 = vsel %vm264, %v820, 0
      %v873 = vsel %vm264, %v821, 0
      %v876 = vsel %vm264, %v822, 0
      %v879 = vsel %vm264, %v823, 0
      %v882 = vsel %vm264, %v824, 0
      %v885 = vsel %vm264, %v825, 0
      %v888 = vsel %vm264, %v826, 0
      %v891 = vsel %vm264, %v827, 0
      %v894 = vsel %vm264, %v828, 0
      %v897 = vsel %vm264, %v829, 0
      %v900 = vsel %vm264, %v830, 0
      %v903 = vsel %vm264, %v831, 0
      %v906 = vsel %vm264, %v832, 0
      %v909 = vsel %vm264, %v833, 0
      %v912 = vsel %vm264, %v834, 0
      %v915 = vsel %vm264, %v835, 0
      %v918 = vsel %vm264, %v836, 0
      %v921 = vsel %vm264, %v837, 0
      %v924 = vsel %vm264, %v838, 0
      %v927 = vsel %vm264, %v839, 0
      %v930 = vsel %vm264, %v840, 0
      %v933 = vsel %vm264, %v841, 0
      %v936 = vsel %vm264, %v842, 0
      %v939 = vsel %vm264, %v843, 0
      %v942 = vsel %vm264, %v844, 0
      %v945 = vsel %vm264, %v845, 0
      %947 = vmatprep.subr.mxu0 0.0
      %948 = vmatpush1.xpose.msra.mxu0 %v897
      %949 = vmatprep.subr.mxu0 0.0
      %950 = vmatpush1.xpose.msra.mxu0 %v894
      %951 = vmatprep.subr.mxu0 0.0
      %952 = vmatpush1.xpose.msra.mxu0 %v891
      %953 = vmatprep.subr.mxu0 0.0
      %954 = vmatpush1.xpose.msra.mxu0 %v888
      %955 = vmatprep.subr.mxu0 0.0
      %956 = vmatpush1.xpose.msra.mxu0 %v885
      %957 = vmatprep.subr.mxu0 0.0
      %958 = vmatpush1.xpose.msra.mxu0 %v882
      %959 = vmatprep.subr.mxu0 0.0
      %960 = vmatpush1.xpose.msra.mxu0 %v879
      %961 = vmatprep.subr.mxu0 0.0
      %962 = vmatpush1.xpose.msra.mxu0 %v876
      %963 = vmatprep.subr.mxu0 0.0
      %964 = vmatpush1.xpose.msra.mxu0 %v873
      %965 = vmatprep.subr.mxu0 0.0
      %966 = vmatpush1.xpose.msra.mxu0 %v870
      %967 = vmatprep.subr.mxu0 0.0
      %968 = vmatpush1.xpose.msra.mxu0 %v867
      %969 = vmatprep.subr.mxu0 0.0
      %970 = vmatpush1.xpose.msra.mxu0 %v864
      %971 = vmatprep.subr.mxu0 0.0
      %972 = vmatpush1.xpose.msra.mxu0 %v861
      %973 = vmatprep.subr.mxu0 0.0
      %974 = vmatpush1.xpose.msra.mxu0 %v858
      %975 = vmatprep.subr.mxu0 0.0
      %976 = vmatpush1.xpose.msra.mxu0 %v855
      %977 = vmatprep.subr.mxu0 0.0
      %978 = vmatpush1.xpose.msra.mxu0 %v852
      %979 = vmatprep.subr.mxu0 0.0
      %980 = vmatpush2.xpose.msra.mxu0 %v945
      %981 = vmatprep.subr.mxu0 0.0
      %982 = vmatpush2.xpose.msra.mxu0 %v942
      %983 = vmatprep.subr.mxu0 0.0
      %984 = vmatpush2.xpose.msra.mxu0 %v939
      %985 = vmatprep.subr.mxu0 0.0
      %986 = vmatpush2.xpose.msra.mxu0 %v936
      %987 = vmatprep.subr.mxu0 0.0
      %988 = vmatpush2.xpose.msra.mxu0 %v933
      %989 = vmatprep.subr.mxu0 0.0
      %990 = vmatpush2.xpose.msra.mxu0 %v930
      %991 = vmatprep.subr.mxu0 0.0
      %992 = vmatpush2.xpose.msra.mxu0 %v927
      %993 = vmatprep.subr.mxu0 0.0
      %994 = vmatpush2.xpose.msra.mxu0 %v924
      %995 = vmatprep.subr.mxu0 0.0
      %996 = vmatpush2.xpose.msra.mxu0 %v921
      %997 = vmatprep.subr.mxu0 0.0
      %998 = vmatpush2.xpose.msra.mxu0 %v918
      %999 = vmatprep.subr.mxu0 0.0
      %1000 = vmatpush2.xpose.msra.mxu0 %v915
      %1001 = vmatprep.subr.mxu0 0.0
      %1002 = vmatpush2.xpose.msra.mxu0 %v912
      %1003 = vmatprep.subr.mxu0 0.0
      %1004 = vmatpush2.xpose.msra.mxu0 %v909
      %1005 = vmatprep.subr.mxu0 0.0
      %1006 = vmatpush2.xpose.msra.mxu0 %v906
      %1007 = vmatprep.subr.mxu0 0.0
      %1008 = vmatpush2.xpose.msra.mxu0 %v903
      %1009 = vmatprep.subr.mxu0 0.0
      %1010 = vmatpush2.xpose.msra.mxu0 %v900
      %1011 = vmatprep.mubr.f32.mxu0 0.0
      %1012 = vmatmul.mubr.f32.gmra.mxu0 %v849
      %v1013 = vpop.f32.mrf.mxu0
      %v1014 = vadd.f32 0.0, %v1013
      %v1015 = vpop.f32.mrf.mxu0
      %v1016 = vadd.f32 0.0, %v1015
      %1017 = vdwg.mxu0
      %v1018 = vadd.f32 %v809, %v1014
      %v1019 = vadd.f32 %v810, %v1016
      %v1020 = vld [vmem:[%s813 + $0x1] sm:$0xff]
      %v1021 = vld [vmem:[%s813 + $0x9] sm:$0xff]
      %v1022 = vld [vmem:[%s813 + $0x19] sm:$0xff]
      %v1023 = vld [vmem:[%s813 + $0x21] sm:$0xff]
      %v1024 = vld [vmem:[%s813 + $0x31] sm:$0xff]
      %v1025 = vld [vmem:[%s813 + $0x39] sm:$0xff]
      %v1026 = vld [vmem:[%s813 + $0x49] sm:$0xff]
      %v1027 = vld [vmem:[%s813 + $0x51] sm:$0xff]
      %v1028 = vld [vmem:[%s813 + $0x61] sm:$0xff]
      %v1029 = vld [vmem:[%s813 + $0x69] sm:$0xff]
      %v1030 = vld [vmem:[%s813 + $0x79] sm:$0xff]
      %v1031 = vld [vmem:[%s813 + $0x81] sm:$0xff]
      %v1032 = vld [vmem:[%s813 + $0x91] sm:$0xff]
      %v1033 = vld [vmem:[%s813 + $0x99] sm:$0xff]
      %v1034 = vld [vmem:[%s813 + $0xa9] sm:$0xff]
      %v1035 = vld [vmem:[%s813 + $0xb1] sm:$0xff]
      %v1036 = vld [vmem:[%s813 + $0xc1] sm:$0xff]
      %v1037 = vld [vmem:[%s813 + $0xc9] sm:$0xff]
      %v1038 = vld [vmem:[%s813 + $0xd9] sm:$0xff]
      %v1039 = vld [vmem:[%s813 + $0xe1] sm:$0xff]
      %v1040 = vld [vmem:[%s813 + $0xf1] sm:$0xff]
      %v1041 = vld [vmem:[%s813 + $0xf9] sm:$0xff]
      %v1042 = vld [vmem:[%s813 + $0x109] sm:$0xff]
      %v1043 = vld [vmem:[%s813 + $0x111] sm:$0xff]
      %v1044 = vld [vmem:[%s813 + $0x121] sm:$0xff]
      %v1045 = vld [vmem:[%s813 + $0x129] sm:$0xff]
      %v1046 = vld [vmem:[%s813 + $0x139] sm:$0xff]
      %v1047 = vld [vmem:[%s813 + $0x141] sm:$0xff]
      %v1048 = vld [vmem:[%s813 + $0x151] sm:$0xff]
      %v1049 = vld [vmem:[%s813 + $0x159] sm:$0xff]
      %v1050 = vld [vmem:[%s813 + $0x169] sm:$0xff]
      %v1051 = vld [vmem:[%s813 + $0x171] sm:$0xff]
      %s1052 = scalar_lea.vmem %s1, 32
      %v1053 = vld [vmem:[%s1052] sm:$0xff]
      %v1055 = vsel %vm264, %v1053, 0
      %v1058 = vsel %vm264, %v1020, 0
      %v1061 = vsel %vm264, %v1021, 0
      %v1064 = vsel %vm264, %v1022, 0
      %v1067 = vsel %vm264, %v1023, 0
      %v1070 = vsel %vm264, %v1024, 0
      %v1073 = vsel %vm264, %v1025, 0
      %v1076 = vsel %vm264, %v1026, 0
      %v1079 = vsel %vm264, %v1027, 0
      %v1082 = vsel %vm264, %v1028, 0
      %v1085 = vsel %vm264, %v1029, 0
      %v1088 = vsel %vm264, %v1030, 0
      %v1091 = vsel %vm264, %v1031, 0
      %v1094 = vsel %vm264, %v1032, 0
      %v1097 = vsel %vm264, %v1033, 0
      %v1100 = vsel %vm264, %v1034, 0
      %v1103 = vsel %vm264, %v1035, 0
      %v1106 = vsel %vm264, %v1036, 0
      %v1109 = vsel %vm264, %v1037, 0
      %v1112 = vsel %vm264, %v1038, 0
      %v1115 = vsel %vm264, %v1039, 0
      %v1118 = vsel %vm264, %v1040, 0
      %v1121 = vsel %vm264, %v1041, 0
      %v1124 = vsel %vm264, %v1042, 0
      %v1127 = vsel %vm264, %v1043, 0
      %v1130 = vsel %vm264, %v1044, 0
      %v1133 = vsel %vm264, %v1045, 0
      %v1136 = vsel %vm264, %v1046, 0
      %v1139 = vsel %vm264, %v1047, 0
      %v1142 = vsel %vm264, %v1048, 0
      %v1145 = vsel %vm264, %v1049, 0
      %v1148 = vsel %vm264, %v1050, 0
      %v1151 = vsel %vm264, %v1051, 0
      %1153 = vmatprep.subr.mxu0 0.0
      %1154 = vmatpush1.xpose.msra.mxu0 %v1103
      %1155 = vmatprep.subr.mxu0 0.0
      %1156 = vmatpush1.xpose.msra.mxu0 %v1100
      %1157 = vmatprep.subr.mxu0 0.0
      %1158 = vmatpush1.xpose.msra.mxu0 %v1097
      %1159 = vmatprep.subr.mxu0 0.0
      %1160 = vmatpush1.xpose.msra.mxu0 %v1094
      %1161 = vmatprep.subr.mxu0 0.0
      %1162 = vmatpush1.xpose.msra.mxu0 %v1091
      %1163 = vmatprep.subr.mxu0 0.0
      %1164 = vmatpush1.xpose.msra.mxu0 %v1088
      %1165 = vmatprep.subr.mxu0 0.0
      %1166 = vmatpush1.xpose.msra.mxu0 %v1085
      %1167 = vmatprep.subr.mxu0 0.0
      %1168 = vmatpush1.xpose.msra.mxu0 %v1082
      %1169 = vmatprep.subr.mxu0 0.0
      %1170 = vmatpush1.xpose.msra.mxu0 %v1079
      %1171 = vmatprep.subr.mxu0 0.0
      %1172 = vmatpush1.xpose.msra.mxu0 %v1076
      %1173 = vmatprep.subr.mxu0 0.0
      %1174 = vmatpush1.xpose.msra.mxu0 %v1073
      %1175 = vmatprep.subr.mxu0 0.0
      %1176 = vmatpush1.xpose.msra.mxu0 %v1070
      %1177 = vmatprep.subr.mxu0 0.0
      %1178 = vmatpush1.xpose.msra.mxu0 %v1067
      %1179 = vmatprep.subr.mxu0 0.0
      %1180 = vmatpush1.xpose.msra.mxu0 %v1064
      %1181 = vmatprep.subr.mxu0 0.0
      %1182 = vmatpush1.xpose.msra.mxu0 %v1061
      %1183 = vmatprep.subr.mxu0 0.0
      %1184 = vmatpush1.xpose.msra.mxu0 %v1058
      %1185 = vmatprep.subr.mxu0 0.0
      %1186 = vmatpush2.xpose.msra.mxu0 %v1151
      %1187 = vmatprep.subr.mxu0 0.0
      %1188 = vmatpush2.xpose.msra.mxu0 %v1148
      %1189 = vmatprep.subr.mxu0 0.0
      %1190 = vmatpush2.xpose.msra.mxu0 %v1145
      %1191 = vmatprep.subr.mxu0 0.0
      %1192 = vmatpush2.xpose.msra.mxu0 %v1142
      %1193 = vmatprep.subr.mxu0 0.0
      %1194 = vmatpush2.xpose.msra.mxu0 %v1139
      %1195 = vmatprep.subr.mxu0 0.0
      %1196 = vmatpush2.xpose.msra.mxu0 %v1136
      %1197 = vmatprep.subr.mxu0 0.0
      %1198 = vmatpush2.xpose.msra.mxu0 %v1133
      %1199 = vmatprep.subr.mxu0 0.0
      %1200 = vmatpush2.xpose.msra.mxu0 %v1130
      %1201 = vmatprep.subr.mxu0 0.0
      %1202 = vmatpush2.xpose.msra.mxu0 %v1127
      %1203 = vmatprep.subr.mxu0 0.0
      %1204 = vmatpush2.xpose.msra.mxu0 %v1124
      %1205 = vmatprep.subr.mxu0 0.0
      %1206 = vmatpush2.xpose.msra.mxu0 %v1121
      %1207 = vmatprep.subr.mxu0 0.0
      %1208 = vmatpush2.xpose.msra.mxu0 %v1118
      %1209 = vmatprep.subr.mxu0 0.0
      %1210 = vmatpush2.xpose.msra.mxu0 %v1115
      %1211 = vmatprep.subr.mxu0 0.0
      %1212 = vmatpush2.xpose.msra.mxu0 %v1112
      %1213 = vmatprep.subr.mxu0 0.0
      %1214 = vmatpush2.xpose.msra.mxu0 %v1109
      %1215 = vmatprep.subr.mxu0 0.0
      %1216 = vmatpush2.xpose.msra.mxu0 %v1106
      %1217 = vmatprep.mubr.f32.mxu0 0.0
      %1218 = vmatmul.mubr.f32.gmra.mxu0 %v1055
      %v1219 = vpop.f32.mrf.mxu0
      %v1220 = vadd.f32 0.0, %v1219
      %v1221 = vpop.f32.mrf.mxu0
      %v1222 = vadd.f32 0.0, %v1221
      %1223 = vdwg.mxu0
      %v1224 = vadd.f32 %v1018, %v1220
      %v1225 = vadd.f32 %v1019, %v1222
      %v1226 = vld [vmem:[%s813 + $0x2] sm:$0xff]
      %v1227 = vld [vmem:[%s813 + $0xa] sm:$0xff]
      %v1228 = vld [vmem:[%s813 + $0x1a] sm:$0xff]
      %v1229 = vld [vmem:[%s813 + $0x22] sm:$0xff]
      %v1230 = vld [vmem:[%s813 + $0x32] sm:$0xff]
      %v1231 = vld [vmem:[%s813 + $0x3a] sm:$0xff]
      %v1232 = vld [vmem:[%s813 + $0x4a] sm:$0xff]
      %v1233 = vld [vmem:[%s813 + $0x52] sm:$0xff]
      %v1234 = vld [vmem:[%s813 + $0x62] sm:$0xff]
      %v1235 = vld [vmem:[%s813 + $0x6a] sm:$0xff]
      %v1236 = vld [vmem:[%s813 + $0x7a] sm:$0xff]
      %v1237 = vld [vmem:[%s813 + $0x82] sm:$0xff]
      %v1238 = vld [vmem:[%s813 + $0x92] sm:$0xff]
      %v1239 = vld [vmem:[%s813 + $0x9a] sm:$0xff]
      %v1240 = vld [vmem:[%s813 + $0xaa] sm:$0xff]
      %v1241 = vld [vmem:[%s813 + $0xb2] sm:$0xff]
      %v1242 = vld [vmem:[%s813 + $0xc2] sm:$0xff]
      %v1243 = vld [vmem:[%s813 + $0xca] sm:$0xff]
      %v1244 = vld [vmem:[%s813 + $0xda] sm:$0xff]
      %v1245 = vld [vmem:[%s813 + $0xe2] sm:$0xff]
      %v1246 = vld [vmem:[%s813 + $0xf2] sm:$0xff]
      %v1247 = vld [vmem:[%s813 + $0xfa] sm:$0xff]
      %v1248 = vld [vmem:[%s813 + $0x10a] sm:$0xff]
      %v1249 = vld [vmem:[%s813 + $0x112] sm:$0xff]
      %v1250 = vld [vmem:[%s813 + $0x122] sm:$0xff]
      %v1251 = vld [vmem:[%s813 + $0x12a] sm:$0xff]
      %v1252 = vld [vmem:[%s813 + $0x13a] sm:$0xff]
      %v1253 = vld [vmem:[%s813 + $0x142] sm:$0xff]
      %v1254 = vld [vmem:[%s813 + $0x152] sm:$0xff]
      %v1255 = vld [vmem:[%s813 + $0x15a] sm:$0xff]
      %v1256 = vld [vmem:[%s813 + $0x16a] sm:$0xff]
      %v1257 = vld [vmem:[%s813 + $0x172] sm:$0xff]
      %s1258 = scalar_lea.vmem %s1, 40
      %v1259 = vld [vmem:[%s1258] sm:$0xff]
      %v1261 = vsel %vm264, %v1259, 0
      %v1264 = vsel %vm264, %v1226, 0
      %v1267 = vsel %vm264, %v1227, 0
      %v1270 = vsel %vm264, %v1228, 0
      %v1273 = vsel %vm264, %v1229, 0
      %v1276 = vsel %vm264, %v1230, 0
      %v1279 = vsel %vm264, %v1231, 0
      %v1282 = vsel %vm264, %v1232, 0
      %v1285 = vsel %vm264, %v1233, 0
      %v1288 = vsel %vm264, %v1234, 0
      %v1291 = vsel %vm264, %v1235, 0
      %v1294 = vsel %vm264, %v1236, 0
      %v1297 = vsel %vm264, %v1237, 0
      %v1300 = vsel %vm264, %v1238, 0
      %v1303 = vsel %vm264, %v1239, 0
      %v1306 = vsel %vm264, %v1240, 0
      %v1309 = vsel %vm264, %v1241, 0
      %v1312 = vsel %vm264, %v1242, 0
      %v1315 = vsel %vm264, %v1243, 0
      %v1318 = vsel %vm264, %v1244, 0
      %v1321 = vsel %vm264, %v1245, 0
      %v1324 = vsel %vm264, %v1246, 0
      %v1327 = vsel %vm264, %v1247, 0
      %v1330 = vsel %vm264, %v1248, 0
      %v1333 = vsel %vm264, %v1249, 0
      %v1336 = vsel %vm264, %v1250, 0
      %v1339 = vsel %vm264, %v1251, 0
      %v1342 = vsel %vm264, %v1252, 0
      %v1345 = vsel %vm264, %v1253, 0
      %v1348 = vsel %vm264, %v1254, 0
      %v1351 = vsel %vm264, %v1255, 0
      %v1354 = vsel %vm264, %v1256, 0
      %v1357 = vsel %vm264, %v1257, 0
      %1359 = vmatprep.subr.mxu0 0.0
      %1360 = vmatpush1.xpose.msra.mxu0 %v1309
      %1361 = vmatprep.subr.mxu0 0.0
      %1362 = vmatpush1.xpose.msra.mxu0 %v1306
      %1363 = vmatprep.subr.mxu0 0.0
      %1364 = vmatpush1.xpose.msra.mxu0 %v1303
      %1365 = vmatprep.subr.mxu0 0.0
      %1366 = vmatpush1.xpose.msra.mxu0 %v1300
      %1367 = vmatprep.subr.mxu0 0.0
      %1368 = vmatpush1.xpose.msra.mxu0 %v1297
      %1369 = vmatprep.subr.mxu0 0.0
      %1370 = vmatpush1.xpose.msra.mxu0 %v1294
      %1371 = vmatprep.subr.mxu0 0.0
      %1372 = vmatpush1.xpose.msra.mxu0 %v1291
      %1373 = vmatprep.subr.mxu0 0.0
      %1374 = vmatpush1.xpose.msra.mxu0 %v1288
      %1375 = vmatprep.subr.mxu0 0.0
      %1376 = vmatpush1.xpose.msra.mxu0 %v1285
      %1377 = vmatprep.subr.mxu0 0.0
      %1378 = vmatpush1.xpose.msra.mxu0 %v1282
      %1379 = vmatprep.subr.mxu0 0.0
      %1380 = vmatpush1.xpose.msra.mxu0 %v1279
      %1381 = vmatprep.subr.mxu0 0.0
      %1382 = vmatpush1.xpose.msra.mxu0 %v1276
      %1383 = vmatprep.subr.mxu0 0.0
      %1384 = vmatpush1.xpose.msra.mxu0 %v1273
      %1385 = vmatprep.subr.mxu0 0.0
      %1386 = vmatpush1.xpose.msra.mxu0 %v1270
      %1387 = vmatprep.subr.mxu0 0.0
      %1388 = vmatpush1.xpose.msra.mxu0 %v1267
      %1389 = vmatprep.subr.mxu0 0.0
      %1390 = vmatpush1.xpose.msra.mxu0 %v1264
      %1391 = vmatprep.subr.mxu0 0.0
      %1392 = vmatpush2.xpose.msra.mxu0 %v1357
      %1393 = vmatprep.subr.mxu0 0.0
      %1394 = vmatpush2.xpose.msra.mxu0 %v1354
      %1395 = vmatprep.subr.mxu0 0.0
      %1396 = vmatpush2.xpose.msra.mxu0 %v1351
      %1397 = vmatprep.subr.mxu0 0.0
      %1398 = vmatpush2.xpose.msra.mxu0 %v1348
      %1399 = vmatprep.subr.mxu0 0.0
      %1400 = vmatpush2.xpose.msra.mxu0 %v1345
      %1401 = vmatprep.subr.mxu0 0.0
      %1402 = vmatpush2.xpose.msra.mxu0 %v1342
      %1403 = vmatprep.subr.mxu0 0.0
      %1404 = vmatpush2.xpose.msra.mxu0 %v1339
      %1405 = vmatprep.subr.mxu0 0.0
      %1406 = vmatpush2.xpose.msra.mxu0 %v1336
      %1407 = vmatprep.subr.mxu0 0.0
      %1408 = vmatpush2.xpose.msra.mxu0 %v1333
      %1409 = vmatprep.subr.mxu0 0.0
      %1410 = vmatpush2.xpose.msra.mxu0 %v1330
      %1411 = vmatprep.subr.mxu0 0.0
      %1412 = vmatpush2.xpose.msra.mxu0 %v1327
      %1413 = vmatprep.subr.mxu0 0.0
      %1414 = vmatpush2.xpose.msra.mxu0 %v1324
      %1415 = vmatprep.subr.mxu0 0.0
      %1416 = vmatpush2.xpose.msra.mxu0 %v1321
      %1417 = vmatprep.subr.mxu0 0.0
      %1418 = vmatpush2.xpose.msra.mxu0 %v1318
      %1419 = vmatprep.subr.mxu0 0.0
      %1420 = vmatpush2.xpose.msra.mxu0 %v1315
      %1421 = vmatprep.subr.mxu0 0.0
      %1422 = vmatpush2.xpose.msra.mxu0 %v1312
      %1423 = vmatprep.mubr.f32.mxu0 0.0
      %1424 = vmatmul.mubr.f32.gmra.mxu0 %v1261
      %v1425 = vpop.f32.mrf.mxu0
      %v1426 = vadd.f32 0.0, %v1425
      %v1427 = vpop.f32.mrf.mxu0
      %v1428 = vadd.f32 0.0, %v1427
      %1429 = vdwg.mxu0
      %v1430 = vadd.f32 %v1224, %v1426
      %v1431 = vadd.f32 %v1225, %v1428
      %s1432 = sadd.s32 %s194, 2
      %s1433 = smul.u32 %s1432, 24
      %s1434 = scalar_lea.vmem %s183, %s1433
      %v1435 = vld [vmem:[%s1434] sm:$0xff]
      %v1436 = vld [vmem:[%s1434 + $0x8] sm:$0xff]
      %v1437 = vld [vmem:[%s1434 + $0x18] sm:$0xff]
      %v1438 = vld [vmem:[%s1434 + $0x20] sm:$0xff]
      %v1439 = vld [vmem:[%s1434 + $0x30] sm:$0xff]
      %v1440 = vld [vmem:[%s1434 + $0x38] sm:$0xff]
      %v1441 = vld [vmem:[%s1434 + $0x48] sm:$0xff]
      %v1442 = vld [vmem:[%s1434 + $0x50] sm:$0xff]
      %v1443 = vld [vmem:[%s1434 + $0x60] sm:$0xff]
      %v1444 = vld [vmem:[%s1434 + $0x68] sm:$0xff]
      %v1445 = vld [vmem:[%s1434 + $0x78] sm:$0xff]
      %v1446 = vld [vmem:[%s1434 + $0x80] sm:$0xff]
      %v1447 = vld [vmem:[%s1434 + $0x90] sm:$0xff]
      %v1448 = vld [vmem:[%s1434 + $0x98] sm:$0xff]
      %v1449 = vld [vmem:[%s1434 + $0xa8] sm:$0xff]
      %v1450 = vld [vmem:[%s1434 + $0xb0] sm:$0xff]
      %v1451 = vld [vmem:[%s1434 + $0xc0] sm:$0xff]
      %v1452 = vld [vmem:[%s1434 + $0xc8] sm:$0xff]
      %v1453 = vld [vmem:[%s1434 + $0xd8] sm:$0xff]
      %v1454 = vld [vmem:[%s1434 + $0xe0] sm:$0xff]
      %v1455 = vld [vmem:[%s1434 + $0xf0] sm:$0xff]
      %v1456 = vld [vmem:[%s1434 + $0xf8] sm:$0xff]
      %v1457 = vld [vmem:[%s1434 + $0x108] sm:$0xff]
      %v1458 = vld [vmem:[%s1434 + $0x110] sm:$0xff]
      %v1459 = vld [vmem:[%s1434 + $0x120] sm:$0xff]
      %v1460 = vld [vmem:[%s1434 + $0x128] sm:$0xff]
      %v1461 = vld [vmem:[%s1434 + $0x138] sm:$0xff]
      %v1462 = vld [vmem:[%s1434 + $0x140] sm:$0xff]
      %v1463 = vld [vmem:[%s1434 + $0x150] sm:$0xff]
      %v1464 = vld [vmem:[%s1434 + $0x158] sm:$0xff]
      %v1465 = vld [vmem:[%s1434 + $0x168] sm:$0xff]
      %v1466 = vld [vmem:[%s1434 + $0x170] sm:$0xff]
      %s1467 = scalar_lea.vmem %s1, 48
      %v1468 = vld [vmem:[%s1467] sm:$0xff]
      %v1470 = vsel %vm264, %v1468, 0
      %v1473 = vsel %vm264, %v1435, 0
      %v1476 = vsel %vm264, %v1436, 0
      %v1479 = vsel %vm264, %v1437, 0
      %v1482 = vsel %vm264, %v1438, 0
      %v1485 = vsel %vm264, %v1439, 0
      %v1488 = vsel %vm264, %v1440, 0
      %v1491 = vsel %vm264, %v1441, 0
      %v1494 = vsel %vm264, %v1442, 0
      %v1497 = vsel %vm264, %v1443, 0
      %v1500 = vsel %vm264, %v1444, 0
      %v1503 = vsel %vm264, %v1445, 0
      %v1506 = vsel %vm264, %v1446, 0
      %v1509 = vsel %vm264, %v1447, 0
      %v1512 = vsel %vm264, %v1448, 0
      %v1515 = vsel %vm264, %v1449, 0
      %v1518 = vsel %vm264, %v1450, 0
      %v1521 = vsel %vm264, %v1451, 0
      %v1524 = vsel %vm264, %v1452, 0
      %v1527 = vsel %vm264, %v1453, 0
      %v1530 = vsel %vm264, %v1454, 0
      %v1533 = vsel %vm264, %v1455, 0
      %v1536 = vsel %vm264, %v1456, 0
      %v1539 = vsel %vm264, %v1457, 0
      %v1542 = vsel %vm264, %v1458, 0
      %v1545 = vsel %vm264, %v1459, 0
      %v1548 = vsel %vm264, %v1460, 0
      %v1551 = vsel %vm264, %v1461, 0
      %v1554 = vsel %vm264, %v1462, 0
      %v1557 = vsel %vm264, %v1463, 0
      %v1560 = vsel %vm264, %v1464, 0
      %v1563 = vsel %vm264, %v1465, 0
      %v1566 = vsel %vm264, %v1466, 0
      %1568 = vmatprep.subr.mxu0 0.0
      %1569 = vmatpush1.xpose.msra.mxu0 %v1518
      %1570 = vmatprep.subr.mxu0 0.0
      %1571 = vmatpush1.xpose.msra.mxu0 %v1515
      %1572 = vmatprep.subr.mxu0 0.0
      %1573 = vmatpush1.xpose.msra.mxu0 %v1512
      %1574 = vmatprep.subr.mxu0 0.0
      %1575 = vmatpush1.xpose.msra.mxu0 %v1509
      %1576 = vmatprep.subr.mxu0 0.0
      %1577 = vmatpush1.xpose.msra.mxu0 %v1506
      %1578 = vmatprep.subr.mxu0 0.0
      %1579 = vmatpush1.xpose.msra.mxu0 %v1503
      %1580 = vmatprep.subr.mxu0 0.0
      %1581 = vmatpush1.xpose.msra.mxu0 %v1500
      %1582 = vmatprep.subr.mxu0 0.0
      %1583 = vmatpush1.xpose.msra.mxu0 %v1497
      %1584 = vmatprep.subr.mxu0 0.0
      %1585 = vmatpush1.xpose.msra.mxu0 %v1494
      %1586 = vmatprep.subr.mxu0 0.0
      %1587 = vmatpush1.xpose.msra.mxu0 %v1491
      %1588 = vmatprep.subr.mxu0 0.0
      %1589 = vmatpush1.xpose.msra.mxu0 %v1488
      %1590 = vmatprep.subr.mxu0 0.0
      %1591 = vmatpush1.xpose.msra.mxu0 %v1485
      %1592 = vmatprep.subr.mxu0 0.0
      %1593 = vmatpush1.xpose.msra.mxu0 %v1482
      %1594 = vmatprep.subr.mxu0 0.0
      %1595 = vmatpush1.xpose.msra.mxu0 %v1479
      %1596 = vmatprep.subr.mxu0 0.0
      %1597 = vmatpush1.xpose.msra.mxu0 %v1476
      %1598 = vmatprep.subr.mxu0 0.0
      %1599 = vmatpush1.xpose.msra.mxu0 %v1473
      %1600 = vmatprep.subr.mxu0 0.0
      %1601 = vmatpush2.xpose.msra.mxu0 %v1566
      %1602 = vmatprep.subr.mxu0 0.0
      %1603 = vmatpush2.xpose.msra.mxu0 %v1563
      %1604 = vmatprep.subr.mxu0 0.0
      %1605 = vmatpush2.xpose.msra.mxu0 %v1560
      %1606 = vmatprep.subr.mxu0 0.0
      %1607 = vmatpush2.xpose.msra.mxu0 %v1557
      %1608 = vmatprep.subr.mxu0 0.0
      %1609 = vmatpush2.xpose.msra.mxu0 %v1554
      %1610 = vmatprep.subr.mxu0 0.0
      %1611 = vmatpush2.xpose.msra.mxu0 %v1551
      %1612 = vmatprep.subr.mxu0 0.0
      %1613 = vmatpush2.xpose.msra.mxu0 %v1548
      %1614 = vmatprep.subr.mxu0 0.0
      %1615 = vmatpush2.xpose.msra.mxu0 %v1545
      %1616 = vmatprep.subr.mxu0 0.0
      %1617 = vmatpush2.xpose.msra.mxu0 %v1542
      %1618 = vmatprep.subr.mxu0 0.0
      %1619 = vmatpush2.xpose.msra.mxu0 %v1539
      %1620 = vmatprep.subr.mxu0 0.0
      %1621 = vmatpush2.xpose.msra.mxu0 %v1536
      %1622 = vmatprep.subr.mxu0 0.0
      %1623 = vmatpush2.xpose.msra.mxu0 %v1533
      %1624 = vmatprep.subr.mxu0 0.0
      %1625 = vmatpush2.xpose.msra.mxu0 %v1530
      %1626 = vmatprep.subr.mxu0 0.0
      %1627 = vmatpush2.xpose.msra.mxu0 %v1527
      %1628 = vmatprep.subr.mxu0 0.0
      %1629 = vmatpush2.xpose.msra.mxu0 %v1524
      %1630 = vmatprep.subr.mxu0 0.0
      %1631 = vmatpush2.xpose.msra.mxu0 %v1521
      %1632 = vmatprep.mubr.f32.mxu0 0.0
      %1633 = vmatmul.mubr.f32.gmra.mxu0 %v1470
      %v1634 = vpop.f32.mrf.mxu0
      %v1635 = vadd.f32 0.0, %v1634
      %v1636 = vpop.f32.mrf.mxu0
      %v1637 = vadd.f32 0.0, %v1636
      %1638 = vdwg.mxu0
      %v1639 = vadd.f32 %v1430, %v1635
      %v1640 = vadd.f32 %v1431, %v1637
      %v1641 = vld [vmem:[%s1434 + $0x1] sm:$0xff]
      %v1642 = vld [vmem:[%s1434 + $0x9] sm:$0xff]
      %v1643 = vld [vmem:[%s1434 + $0x19] sm:$0xff]
      %v1644 = vld [vmem:[%s1434 + $0x21] sm:$0xff]
      %v1645 = vld [vmem:[%s1434 + $0x31] sm:$0xff]
      %v1646 = vld [vmem:[%s1434 + $0x39] sm:$0xff]
      %v1647 = vld [vmem:[%s1434 + $0x49] sm:$0xff]
      %v1648 = vld [vmem:[%s1434 + $0x51] sm:$0xff]
      %v1649 = vld [vmem:[%s1434 + $0x61] sm:$0xff]
      %v1650 = vld [vmem:[%s1434 + $0x69] sm:$0xff]
      %v1651 = vld [vmem:[%s1434 + $0x79] sm:$0xff]
      %v1652 = vld [vmem:[%s1434 + $0x81] sm:$0xff]
      %v1653 = vld [vmem:[%s1434 + $0x91] sm:$0xff]
      %v1654 = vld [vmem:[%s1434 + $0x99] sm:$0xff]
      %v1655 = vld [vmem:[%s1434 + $0xa9] sm:$0xff]
      %v1656 = vld [vmem:[%s1434 + $0xb1] sm:$0xff]
      %v1657 = vld [vmem:[%s1434 + $0xc1] sm:$0xff]
      %v1658 = vld [vmem:[%s1434 + $0xc9] sm:$0xff]
      %v1659 = vld [vmem:[%s1434 + $0xd9] sm:$0xff]
      %v1660 = vld [vmem:[%s1434 + $0xe1] sm:$0xff]
      %v1661 = vld [vmem:[%s1434 + $0xf1] sm:$0xff]
      %v1662 = vld [vmem:[%s1434 + $0xf9] sm:$0xff]
      %v1663 = vld [vmem:[%s1434 + $0x109] sm:$0xff]
      %v1664 = vld [vmem:[%s1434 + $0x111] sm:$0xff]
      %v1665 = vld [vmem:[%s1434 + $0x121] sm:$0xff]
      %v1666 = vld [vmem:[%s1434 + $0x129] sm:$0xff]
      %v1667 = vld [vmem:[%s1434 + $0x139] sm:$0xff]
      %v1668 = vld [vmem:[%s1434 + $0x141] sm:$0xff]
      %v1669 = vld [vmem:[%s1434 + $0x151] sm:$0xff]
      %v1670 = vld [vmem:[%s1434 + $0x159] sm:$0xff]
      %v1671 = vld [vmem:[%s1434 + $0x169] sm:$0xff]
      %v1672 = vld [vmem:[%s1434 + $0x171] sm:$0xff]
      %s1673 = scalar_lea.vmem %s1, 56
      %v1674 = vld [vmem:[%s1673] sm:$0xff]
      %v1676 = vsel %vm264, %v1674, 0
      %v1679 = vsel %vm264, %v1641, 0
      %v1682 = vsel %vm264, %v1642, 0
      %v1685 = vsel %vm264, %v1643, 0
      %v1688 = vsel %vm264, %v1644, 0
      %v1691 = vsel %vm264, %v1645, 0
      %v1694 = vsel %vm264, %v1646, 0
      %v1697 = vsel %vm264, %v1647, 0
      %v1700 = vsel %vm264, %v1648, 0
      %v1703 = vsel %vm264, %v1649, 0
      %v1706 = vsel %vm264, %v1650, 0
      %v1709 = vsel %vm264, %v1651, 0
      %v1712 = vsel %vm264, %v1652, 0
      %v1715 = vsel %vm264, %v1653, 0
      %v1718 = vsel %vm264, %v1654, 0
      %v1721 = vsel %vm264, %v1655, 0
      %v1724 = vsel %vm264, %v1656, 0
      %v1727 = vsel %vm264, %v1657, 0
      %v1730 = vsel %vm264, %v1658, 0
      %v1733 = vsel %vm264, %v1659, 0
      %v1736 = vsel %vm264, %v1660, 0
      %v1739 = vsel %vm264, %v1661, 0
      %v1742 = vsel %vm264, %v1662, 0
      %v1745 = vsel %vm264, %v1663, 0
      %v1748 = vsel %vm264, %v1664, 0
      %v1751 = vsel %vm264, %v1665, 0
      %v1754 = vsel %vm264, %v1666, 0
      %v1757 = vsel %vm264, %v1667, 0
      %v1760 = vsel %vm264, %v1668, 0
      %v1763 = vsel %vm264, %v1669, 0
      %v1766 = vsel %vm264, %v1670, 0
      %v1769 = vsel %vm264, %v1671, 0
      %v1772 = vsel %vm264, %v1672, 0
      %1774 = vmatprep.subr.mxu0 0.0
      %1775 = vmatpush1.xpose.msra.mxu0 %v1724
      %1776 = vmatprep.subr.mxu0 0.0
      %1777 = vmatpush1.xpose.msra.mxu0 %v1721
      %1778 = vmatprep.subr.mxu0 0.0
      %1779 = vmatpush1.xpose.msra.mxu0 %v1718
      %1780 = vmatprep.subr.mxu0 0.0
      %1781 = vmatpush1.xpose.msra.mxu0 %v1715
      %1782 = vmatprep.subr.mxu0 0.0
      %1783 = vmatpush1.xpose.msra.mxu0 %v1712
      %1784 = vmatprep.subr.mxu0 0.0
      %1785 = vmatpush1.xpose.msra.mxu0 %v1709
      %1786 = vmatprep.subr.mxu0 0.0
      %1787 = vmatpush1.xpose.msra.mxu0 %v1706
      %1788 = vmatprep.subr.mxu0 0.0
      %1789 = vmatpush1.xpose.msra.mxu0 %v1703
      %1790 = vmatprep.subr.mxu0 0.0
      %1791 = vmatpush1.xpose.msra.mxu0 %v1700
      %1792 = vmatprep.subr.mxu0 0.0
      %1793 = vmatpush1.xpose.msra.mxu0 %v1697
      %1794 = vmatprep.subr.mxu0 0.0
      %1795 = vmatpush1.xpose.msra.mxu0 %v1694
      %1796 = vmatprep.subr.mxu0 0.0
      %1797 = vmatpush1.xpose.msra.mxu0 %v1691
      %1798 = vmatprep.subr.mxu0 0.0
      %1799 = vmatpush1.xpose.msra.mxu0 %v1688
      %1800 = vmatprep.subr.mxu0 0.0
      %1801 = vmatpush1.xpose.msra.mxu0 %v1685
      %1802 = vmatprep.subr.mxu0 0.0
      %1803 = vmatpush1.xpose.msra.mxu0 %v1682
      %1804 = vmatprep.subr.mxu0 0.0
      %1805 = vmatpush1.xpose.msra.mxu0 %v1679
      %1806 = vmatprep.subr.mxu0 0.0
      %1807 = vmatpush2.xpose.msra.mxu0 %v1772
      %1808 = vmatprep.subr.mxu0 0.0
      %1809 = vmatpush2.xpose.msra.mxu0 %v1769
      %1810 = vmatprep.subr.mxu0 0.0
      %1811 = vmatpush2.xpose.msra.mxu0 %v1766
      %1812 = vmatprep.subr.mxu0 0.0
      %1813 = vmatpush2.xpose.msra.mxu0 %v1763
      %1814 = vmatprep.subr.mxu0 0.0
      %1815 = vmatpush2.xpose.msra.mxu0 %v1760
      %1816 = vmatprep.subr.mxu0 0.0
      %1817 = vmatpush2.xpose.msra.mxu0 %v1757
      %1818 = vmatprep.subr.mxu0 0.0
      %1819 = vmatpush2.xpose.msra.mxu0 %v1754
      %1820 = vmatprep.subr.mxu0 0.0
      %1821 = vmatpush2.xpose.msra.mxu0 %v1751
      %1822 = vmatprep.subr.mxu0 0.0
      %1823 = vmatpush2.xpose.msra.mxu0 %v1748
      %1824 = vmatprep.subr.mxu0 0.0
      %1825 = vmatpush2.xpose.msra.mxu0 %v1745
      %1826 = vmatprep.subr.mxu0 0.0
      %1827 = vmatpush2.xpose.msra.mxu0 %v1742
      %1828 = vmatprep.subr.mxu0 0.0
      %1829 = vmatpush2.xpose.msra.mxu0 %v1739
      %1830 = vmatprep.subr.mxu0 0.0
      %1831 = vmatpush2.xpose.msra.mxu0 %v1736
      %1832 = vmatprep.subr.mxu0 0.0
      %1833 = vmatpush2.xpose.msra.mxu0 %v1733
      %1834 = vmatprep.subr.mxu0 0.0
      %1835 = vmatpush2.xpose.msra.mxu0 %v1730
      %1836 = vmatprep.subr.mxu0 0.0
      %1837 = vmatpush2.xpose.msra.mxu0 %v1727
      %1838 = vmatprep.mubr.f32.mxu0 0.0
      %1839 = vmatmul.mubr.f32.gmra.mxu0 %v1676
      %v1840 = vpop.f32.mrf.mxu0
      %v1841 = vadd.f32 0.0, %v1840
      %v1842 = vpop.f32.mrf.mxu0
      %v1843 = vadd.f32 0.0, %v1842
      %1844 = vdwg.mxu0
      %v1845 = vadd.f32 %v1639, %v1841
      %v1846 = vadd.f32 %v1640, %v1843
      %v1847 = vld [vmem:[%s1434 + $0x2] sm:$0xff]
      %v1848 = vld [vmem:[%s1434 + $0xa] sm:$0xff]
      %v1849 = vld [vmem:[%s1434 + $0x1a] sm:$0xff]
      %v1850 = vld [vmem:[%s1434 + $0x22] sm:$0xff]
      %v1851 = vld [vmem:[%s1434 + $0x32] sm:$0xff]
      %v1852 = vld [vmem:[%s1434 + $0x3a] sm:$0xff]
      %v1853 = vld [vmem:[%s1434 + $0x4a] sm:$0xff]
      %v1854 = vld [vmem:[%s1434 + $0x52] sm:$0xff]
      %v1855 = vld [vmem:[%s1434 + $0x62] sm:$0xff]
      %v1856 = vld [vmem:[%s1434 + $0x6a] sm:$0xff]
      %v1857 = vld [vmem:[%s1434 + $0x7a] sm:$0xff]
      %v1858 = vld [vmem:[%s1434 + $0x82] sm:$0xff]
      %v1859 = vld [vmem:[%s1434 + $0x92] sm:$0xff]
      %v1860 = vld [vmem:[%s1434 + $0x9a] sm:$0xff]
      %v1861 = vld [vmem:[%s1434 + $0xaa] sm:$0xff]
      %v1862 = vld [vmem:[%s1434 + $0xb2] sm:$0xff]
      %v1863 = vld [vmem:[%s1434 + $0xc2] sm:$0xff]
      %v1864 = vld [vmem:[%s1434 + $0xca] sm:$0xff]
      %v1865 = vld [vmem:[%s1434 + $0xda] sm:$0xff]
      %v1866 = vld [vmem:[%s1434 + $0xe2] sm:$0xff]
      %v1867 = vld [vmem:[%s1434 + $0xf2] sm:$0xff]
      %v1868 = vld [vmem:[%s1434 + $0xfa] sm:$0xff]
      %v1869 = vld [vmem:[%s1434 + $0x10a] sm:$0xff]
      %v1870 = vld [vmem:[%s1434 + $0x112] sm:$0xff]
      %v1871 = vld [vmem:[%s1434 + $0x122] sm:$0xff]
      %v1872 = vld [vmem:[%s1434 + $0x12a] sm:$0xff]
      %v1873 = vld [vmem:[%s1434 + $0x13a] sm:$0xff]
      %v1874 = vld [vmem:[%s1434 + $0x142] sm:$0xff]
      %v1875 = vld [vmem:[%s1434 + $0x152] sm:$0xff]
      %v1876 = vld [vmem:[%s1434 + $0x15a] sm:$0xff]
      %v1877 = vld [vmem:[%s1434 + $0x16a] sm:$0xff]
      %v1878 = vld [vmem:[%s1434 + $0x172] sm:$0xff]
      %s1879 = scalar_lea.vmem %s1, 64
      %v1880 = vld [vmem:[%s1879] sm:$0xff]
      %v1882 = vsel %vm264, %v1880, 0
      %v1885 = vsel %vm264, %v1847, 0
      %v1888 = vsel %vm264, %v1848, 0
      %v1891 = vsel %vm264, %v1849, 0
      %v1894 = vsel %vm264, %v1850, 0
      %v1897 = vsel %vm264, %v1851, 0
      %v1900 = vsel %vm264, %v1852, 0
      %v1903 = vsel %vm264, %v1853, 0
      %v1906 = vsel %vm264, %v1854, 0
      %v1909 = vsel %vm264, %v1855, 0
      %v1912 = vsel %vm264, %v1856, 0
      %v1915 = vsel %vm264, %v1857, 0
      %v1918 = vsel %vm264, %v1858, 0
      %v1921 = vsel %vm264, %v1859, 0
      %v1924 = vsel %vm264, %v1860, 0
      %v1927 = vsel %vm264, %v1861, 0
      %v1930 = vsel %vm264, %v1862, 0
      %v1933 = vsel %vm264, %v1863, 0
      %v1936 = vsel %vm264, %v1864, 0
      %v1939 = vsel %vm264, %v1865, 0
      %v1942 = vsel %vm264, %v1866, 0
      %v1945 = vsel %vm264, %v1867, 0
      %v1948 = vsel %vm264, %v1868, 0
      %v1951 = vsel %vm264, %v1869, 0
      %v1954 = vsel %vm264, %v1870, 0
      %v1957 = vsel %vm264, %v1871, 0
      %v1960 = vsel %vm264, %v1872, 0
      %v1963 = vsel %vm264, %v1873, 0
      %v1966 = vsel %vm264, %v1874, 0
      %v1969 = vsel %vm264, %v1875, 0
      %v1972 = vsel %vm264, %v1876, 0
      %v1975 = vsel %vm264, %v1877, 0
      %v1978 = vsel %vm264, %v1878, 0
      %1980 = vmatprep.subr.mxu0 0.0
      %1981 = vmatpush1.xpose.msra.mxu0 %v1930
      %1982 = vmatprep.subr.mxu0 0.0
      %1983 = vmatpush1.xpose.msra.mxu0 %v1927
      %1984 = vmatprep.subr.mxu0 0.0
      %1985 = vmatpush1.xpose.msra.mxu0 %v1924
      %1986 = vmatprep.subr.mxu0 0.0
      %1987 = vmatpush1.xpose.msra.mxu0 %v1921
      %1988 = vmatprep.subr.mxu0 0.0
      %1989 = vmatpush1.xpose.msra.mxu0 %v1918
      %1990 = vmatprep.subr.mxu0 0.0
      %1991 = vmatpush1.xpose.msra.mxu0 %v1915
      %1992 = vmatprep.subr.mxu0 0.0
      %1993 = vmatpush1.xpose.msra.mxu0 %v1912
      %1994 = vmatprep.subr.mxu0 0.0
      %1995 = vmatpush1.xpose.msra.mxu0 %v1909
      %1996 = vmatprep.subr.mxu0 0.0
      %1997 = vmatpush1.xpose.msra.mxu0 %v1906
      %1998 = vmatprep.subr.mxu0 0.0
      %1999 = vmatpush1.xpose.msra.mxu0 %v1903
      %2000 = vmatprep.subr.mxu0 0.0
      %2001 = vmatpush1.xpose.msra.mxu0 %v1900
      %2002 = vmatprep.subr.mxu0 0.0
      %2003 = vmatpush1.xpose.msra.mxu0 %v1897
      %2004 = vmatprep.subr.mxu0 0.0
      %2005 = vmatpush1.xpose.msra.mxu0 %v1894
      %2006 = vmatprep.subr.mxu0 0.0
      %2007 = vmatpush1.xpose.msra.mxu0 %v1891
      %2008 = vmatprep.subr.mxu0 0.0
      %2009 = vmatpush1.xpose.msra.mxu0 %v1888
      %2010 = vmatprep.subr.mxu0 0.0
      %2011 = vmatpush1.xpose.msra.mxu0 %v1885
      %2012 = vmatprep.subr.mxu0 0.0
      %2013 = vmatpush2.xpose.msra.mxu0 %v1978
      %2014 = vmatprep.subr.mxu0 0.0
      %2015 = vmatpush2.xpose.msra.mxu0 %v1975
      %2016 = vmatprep.subr.mxu0 0.0
      %2017 = vmatpush2.xpose.msra.mxu0 %v1972
      %2018 = vmatprep.subr.mxu0 0.0
      %2019 = vmatpush2.xpose.msra.mxu0 %v1969
      %2020 = vmatprep.subr.mxu0 0.0
      %2021 = vmatpush2.xpose.msra.mxu0 %v1966
      %2022 = vmatprep.subr.mxu0 0.0
      %2023 = vmatpush2.xpose.msra.mxu0 %v1963
      %2024 = vmatprep.subr.mxu0 0.0
      %2025 = vmatpush2.xpose.msra.mxu0 %v1960
      %2026 = vmatprep.subr.mxu0 0.0
      %2027 = vmatpush2.xpose.msra.mxu0 %v1957
      %2028 = vmatprep.subr.mxu0 0.0
      %2029 = vmatpush2.xpose.msra.mxu0 %v1954
      %2030 = vmatprep.subr.mxu0 0.0
      %2031 = vmatpush2.xpose.msra.mxu0 %v1951
      %2032 = vmatprep.subr.mxu0 0.0
      %2033 = vmatpush2.xpose.msra.mxu0 %v1948
      %2034 = vmatprep.subr.mxu0 0.0
      %2035 = vmatpush2.xpose.msra.mxu0 %v1945
      %2036 = vmatprep.subr.mxu0 0.0
      %2037 = vmatpush2.xpose.msra.mxu0 %v1942
      %2038 = vmatprep.subr.mxu0 0.0
      %2039 = vmatpush2.xpose.msra.mxu0 %v1939
      %2040 = vmatprep.subr.mxu0 0.0
      %2041 = vmatpush2.xpose.msra.mxu0 %v1936
      %2042 = vmatprep.subr.mxu0 0.0
      %2043 = vmatpush2.xpose.msra.mxu0 %v1933
      %2044 = vmatprep.mubr.f32.mxu0 0.0
      %2045 = vmatmul.mubr.f32.gmra.mxu0 %v1882
      %v2046 = vpop.f32.mrf.mxu0
      %v2047 = vadd.f32 0.0, %v2046
      %v2048 = vpop.f32.mrf.mxu0
      %v2049 = vadd.f32 0.0, %v2048
      %2050 = vdwg.mxu0
      %v2051 = vadd.f32 %v1845, %v2047
      %v2052 = vadd.f32 %v1846, %v2049
      %v2053 = vld [vmem:[%s2] sm:$0xff]
      %2055 = vset.pattern.permute.xlu0 0
      %2056 = vperm.xlu0 %2055, %v2053
      %v2057 = vpop.permute.xlu0 %2056
      %v2059 = vadd.f32 %v2051, %v2057
      %v2060 = vadd.f32 %v2052, %v2057
      %2061 = vst [vmem:[%s192] sm:$0xff] %v2059
      %2062 = vst [vmem:[%s192 + $0x8] sm:$0xff] %v2060
      %s2063 = smul.u32 2, %s19
      %p2064 = scmp.lt.s32.totalorder %s18, 1
      %s2065 = scalar_select %p2064, %s18, 1
      %p2066 = scmp.lt.s32.totalorder %s2063, 1
      %s2067 = scalar_select %p2066, %s2063, 1
      %s2068 = smul.addr %s2065, 2
      %s2069 = sadd.s32 %s2067, %s2068
      %s2070 = smul.addr %s2069, 8
      %s2071 = scalar_lea.vmem %s3, %s2070
      // Predicated region
      $region33: #{conv2d_cd_forward.1} parent=31 // pred_check
        %p2072 = pneg %p114
      $region34: #{conv2d_cd_forward.1} parent=31 // pred_check_branch
        %2074 = sbr.rel (%p2072) target = $region36
      $region35: #{conv2d_cd_forward.1} parent=31 // pred_region
        %s2075 = smul.u32 2, %s19
      $region36: #{conv2d_cd_forward.1} parent=31 // pred_fallthru
        _
    $region32: #{conv2d_cd_forward.1} parent=5 // pred_fallthru
      _
    %p2076 = scmp.le.s32.totalorder 2, %s9
    // Predicated region
    $region37: #{conv2d_cd_forward.1} parent=5 // pred_check
      %p2077 = pneg %p2076
    $region38: #{conv2d_cd_forward.1} parent=5 // pred_check_branch
      %2079 = sbr.rel (%p2077) target = $region40
    $region39: #{conv2d_cd_forward.1} parent=5 // pred_region
      %s2080 = ssub.s32 %s9, 2
      // Predicated region
      $region41: #{conv2d_cd_forward.1} parent=39 // pred_check
        %p2081 = pneg %p120
      $region42: #{conv2d_cd_forward.1} parent=39 // pred_check_branch
        %2083 = sbr.rel (%p2081) target = $region44
      $region43: #{conv2d_cd_forward.1} parent=39 // pred_region
        %s2084 = smul.u32 2, %s21
        %p2085 = scmp.lt.s32.totalorder %s20, 1
        %s2086 = scalar_select %p2085, %s20, 1
        %p2087 = scmp.lt.s32.totalorder %s2084, 1
        %s2088 = scalar_select %p2087, %s2084, 1
        %s2089 = smul.addr %s2086, 2
        %s2090 = sadd.s32 %s2088, %s2089
        %s2091 = smul.addr %s2090, 8
        %s2092 = scalar_lea.vmem %s3, %s2091
      $region44: #{conv2d_cd_forward.1} parent=39 // pred_fallthru
        _
    $region40: #{conv2d_cd_forward.1} parent=5 // pred_fallthru
      _
  $region6: #{conv2d_cd_forward.1} parent=0 // loop_footer
    %s13 = sadd.s32 1, %s9
  $region7: #{conv2d_cd_forward.1} parent=0 // loop_footer_branch
    %8 = sbr.rel target = $region3
  $region8: #{conv2d_cd_forward.1} parent=0 // loop_exit
    _

</llo_original>
